<compile_context>
chip_gen: v7x
topology: tpu7x:2x2x1
jax: 0.10.0
libtpu: 0.0.40
codegen_flags: <defaults>
</compile_context>

<pallas_src>
import jax
import jax.numpy as jnp
from jax.experimental import pallas as pl
from jax.experimental.pallas import tpu as pltpu


# --------------------------------------------------------------------------- #
# Kernel
# --------------------------------------------------------------------------- #
def _joiner_kernel(src_ref, tgt_ref, w_ref, b_ref, out_ref, joint_ref):
    """One (batch, T-tile, V-tile) grid step.

    src_ref  : (1, TILE_T, D)          f32
    tgt_ref  : (1, U_p, D)             f32   (U zero-padded to a multiple of 8)
    w_ref    : (D, TILE_V)             bf16
    b_ref    : (1, TILE_V)             f32
    out_ref  : (1, TILE_T, U, TILE_V)        (U = true, unpadded target length)
    joint_ref: (TILE_T * U_p, D)       bf16 VMEM scratch, reused across V tiles
    """
    tile_t, d = src_ref.shape[1], src_ref.shape[2]
    u_p = tgt_ref.shape[1]
    u_out = out_ref.shape[2]
    tile_v = w_ref.shape[1]

    # The joint slab only depends on (b, t); V is the innermost grid axis, so
    # compute it once and reuse it for every V tile (no recompute, no src re-read).
    @pl.when(pl.program_id(2) == 0)
    def _():
        # f32 broadcast add on the VPU; reshape while still f32 (layout-free since
        # U_p % 8 == 0); a single downcast; relu on packed bf16 vregs.
        # TODO(synk): joiner_activation assumed "relu"; swap jnp.maximum for the
        # configured ACT2FN entry (e.g. jax.nn.gelu) if the config differs.
        joint = (src_ref[0][:, None, :] + tgt_ref[0][None, :, :]).reshape(
            tile_t * u_p, d)
        joint_ref[...] = jnp.maximum(joint.astype(jnp.bfloat16), 0)

    acc = jnp.dot(joint_ref[...], w_ref[...], preferred_element_type=jnp.float32)
    acc = acc + b_ref[...]                                   # (rows, TILE_V) + (1, TILE_V)
    acc = acc.reshape(tile_t, u_p, tile_v)[:, :u_out, :]     # drop padded U rows pre-store
    out_ref[0] = acc.astype(out_ref.dtype)


# --------------------------------------------------------------------------- #
# Tiling helpers
# --------------------------------------------------------------------------- #
def _round_up(x, m):
    return ((x + m - 1) // m) * m


def _cdiv(a, b):
    return -(-a // b)


def _vmem_budget_bytes():
    # ~75% of physical VMEM: v5e/v6e (128 MiB) -> ~96 MiB, v7x (64 MiB) -> ~48 MiB.
    try:
        cap = int(getattr(pltpu.get_tpu_info(), "vmem_capacity_bytes", 0))
    except Exception:
        cap = 0
    if cap <= 0:
        cap = 64 * 1024 * 1024          # conservative (v7x-class) if the query fails
    return max(32 * 1024 * 1024, (cap * 3) // 4)


def _vmem_estimate(tile_t, u_p, u_out, d, tile_v, out_itemsize):
    """Conservative VMEM estimate: double-buffered in/out blocks + scratch + temps."""
    rows = _round_up(tile_t, 8) * u_p
    t_a = _round_up(tile_t, 8)
    d_a = _round_up(d, 128)
    v_a = _round_up(tile_v, 128)
    u_a = _round_up(u_out, 8)
    src = 2 * t_a * d_a * 4
    tgt = 2 * u_p * d_a * 4
    wgt = 2 * d_a * v_a * 2
    bias = 2 * v_a * 4
    out = 2 * t_a * u_a * v_a * out_itemsize
    joint_scratch = rows * d_a * 2
    temps = rows * d_a * 4 + rows * v_a * 4      # f32 joint + f32 matmul accumulator
    return src + tgt + wgt + bias + out + joint_scratch + temps


def _select_tiles(T, u_p, u_out, d, V, out_itemsize, budget, *,
                  max_rows=1024, tile_v_cap=None):
    """Pick (tile_t, tile_v). Prefer a fully VMEM-resident weight (tile_v = V),
    falling back to 256-multiple V tiles; tile_t is the largest (<= rows cap,
    multiple of 8 or full T) that fits the VMEM budget."""
    t_cap = max(8, ((max_rows // max(u_p, 1)) // 8) * 8)

    def largest_tile_t(tile_v):
        cands = []
        if T <= t_cap:
            cands.append(T)                       # full-T block (exempt from x8 rule)
        tt = min(t_cap, (T // 8) * 8)
        while tt >= 8:
            cands.append(tt)
            tt -= 8
        if not cands:
            cands = [T]                           # tiny T (< 8): full-dim block
        for c in dict.fromkeys(cands):
            if _vmem_estimate(c, u_p, u_out, d, tile_v, out_itemsize) <= budget:
                return c
        return None

    v_cands = []
    if tile_v_cap is None or V <= tile_v_cap:
        v_cands.append(V)                         # fully resident weight (preferred)
    v_hi = V if tile_v_cap is None else min(V, tile_v_cap)
    v = min((v_hi // 256) * 256, 4096)
    while v >= 256:
        if v < V and v not in v_cands:
            v_cands.append(v)
        v -= 256
    if v_hi >= 128 and V > 128 and 128 not in v_cands:
        v_cands.append(128)
    if not v_cands:
        v_cands = [V]

    for tile_v in v_cands:
        tt = largest_tile_t(tile_v)
        if tt is not None:
            return tt, tile_v
    return (8 if T >= 8 else T), min(V, 128)      # last resort


# --------------------------------------------------------------------------- #
# Wrapper
# --------------------------------------------------------------------------- #
def rnnt_joiner(source, target, weight_dv, bias, *,
                out_dtype=None, vmem_limit_bytes=None,
                max_rows=None, tile_v_cap=None):
    """source: (B, T, D), target: (B, U, D), weight_dv: (D, V) (= Linear.weight.T),
    bias: (V,).  Returns (B, T, U, V) in `out_dtype` (default: source.dtype;
    pass jnp.bfloat16 to halve the dominant HBM write stream)."""
    B, T, D = source.shape
    Bt, U, Dt = target.shape
    assert (Bt, Dt) == (B, D), "source/target batch or feature mismatch"
    assert weight_dv.shape[0] == D, "weight must be (D, V)"
    V = weight_dv.shape[1]

    out_dtype = source.dtype if out_dtype is None else jnp.dtype(out_dtype)
    out_itemsize = jnp.dtype(out_dtype).itemsize

    budget = _vmem_budget_bytes() if vmem_limit_bytes is None else int(vmem_limit_bytes)
    if max_rows is None:
        # Bigger blocks on 128-MiB-VMEM parts (v5e/v6e); v7x (64 MiB) stays smaller.
        max_rows = 2048 if budget >= 80 * 1024 * 1024 else 1024

    U_p = _round_up(U, 8)
    tile_t, tile_v = _select_tiles(T, U_p, U, D, V, out_itemsize, budget,
                                   max_rows=max_rows, tile_v_cap=tile_v_cap)
    t_tiles = _cdiv(T, tile_t)
    v_tiles = _cdiv(V, tile_v)
    rows = tile_t * U_p

    # Only the (tiny) target tensor is padded (U -> multiple of 8 sublanes).
    # source/weight/bias/output keep their natural shapes: partial boundary blocks
    # are masked by Pallas, and the output is written exactly (B, T, U, V).
    tgt = target if U_p == U else jnp.pad(target, ((0, 0), (0, U_p - U), (0, 0)))
    w = weight_dv.astype(jnp.bfloat16)
    b2 = bias.astype(jnp.float32).reshape(1, V)

    # Cost estimate reflecting the actual DMA traffic of this schedule.
    steps = B * t_tiles * v_tiles
    flops = 2 * rows * D * tile_v * steps
    src_bytes = B * t_tiles * tile_t * D * source.dtype.itemsize     # once per (b, t)
    tgt_bytes = B * U_p * D * tgt.dtype.itemsize                     # once per b
    wb_block = D * tile_v * 2 + tile_v * 4
    wb_bytes = wb_block if v_tiles == 1 else steps * wb_block        # resident if 1 V tile
    out_bytes = B * T * U * V * out_itemsize
    bytes_accessed = int(src_bytes + tgt_bytes + wb_bytes + out_bytes)

    grid = (B, t_tiles, v_tiles)
    # Every output block is written exactly once, so B/T are always parallel
    # (megacore-shardable).  The V axis is only "arbitrary" when V is tiled,
    # because the joint scratch is computed at v == 0 and reused for v > 0.
    semantics = ("parallel", "parallel", "parallel" if v_tiles == 1 else "arbitrary")

    return pl.pallas_call(
        _joiner_kernel,
        out_shape=jax.ShapeDtypeStruct((B, T, U, V), out_dtype),
        grid_spec=pltpu.PrefetchScalarGridSpec(
            num_scalar_prefetch=0,
            grid=grid,
            in_specs=[
                pl.BlockSpec((1, tile_t, D), lambda b, t, v: (b, t, 0)),
                pl.BlockSpec((1, U_p, D), lambda b, t, v: (b, 0, 0)),
                pl.BlockSpec((D, tile_v), lambda b, t, v: (0, v)),
                pl.BlockSpec((1, tile_v), lambda b, t, v: (0, v)),
            ],
            out_specs=pl.BlockSpec((1, tile_t, U, tile_v),
                                   lambda b, t, v: (b, t, 0, v)),
            scratch_shapes=[pltpu.VMEM((rows, D), jnp.bfloat16)],
        ),
        compiler_params=pltpu.CompilerParams(
            dimension_semantics=semantics,
            vmem_limit_bytes=int(budget),
        ),
        cost_estimate=pl.CostEstimate(
            flops=int(flops), transcendentals=0, bytes_accessed=bytes_accessed),
    )(source, tgt, w, b2)


# --------------------------------------------------------------------------- #
# References
# --------------------------------------------------------------------------- #
def rnnt_joiner_ref_f32(source, target, weight_dv, bias):
    joint = jnp.maximum(source[:, :, None, :] + target[:, None, :, :], 0.0)
    return jnp.einsum("btud,dv->btuv", joint, weight_dv) + bias


def rnnt_joiner_ref_bf16(source, target, weight_dv, bias):
    # Matches the kernel's numerics: f32 add, bf16 relu/matmul operands, f32 accum.
    joint = jnp.maximum(source[:, :, None, :] + target[:, None, :, :], 0.0)
    return jnp.einsum("btud,dv->btuv",
                      joint.astype(jnp.bfloat16), weight_dv.astype(jnp.bfloat16),
                      preferred_element_type=jnp.float32) + bias


if __name__ == "__main__":
    # Small shapes that exercise U padding (6 -> 8) plus, in the forced-tiling run,
    # T-tiling with a masked boundary block and V-tiling with scratch reuse.
    B, T, U, D, V = 2, 80, 6, 128, 300

    key = jax.random.PRNGKey(0)
    k_src, k_tgt, k_w, k_b = jax.random.split(key, 4)

    source = jax.random.normal(k_src, (B, T, D), dtype=jnp.float32)
    target = jax.random.normal(k_tgt, (B, U, D), dtype=jnp.float32)
    # Linear(D -> V) params; weight stored pre-transposed as (D, V).
    weight_dv = jax.random.normal(k_w, (D, V), dtype=jnp.float32) * (1.0 / jnp.sqrt(D))
    bias = jax.random.normal(k_b, (V,), dtype=jnp.float32) * 0.01

    ref_bf16 = rnnt_joiner_ref_bf16(source, target, weight_dv, bias)
    ref_f32 = rnnt_joiner_ref_f32(source, target, weight_dv, bias)

    # 1) Default config: weight fully VMEM-resident, exact (B, T, U, V) output.
    out = jax.block_until_ready(rnnt_joiner(source, target, weight_dv, bias))
    assert out.shape == (B, T, U, V)
    assert jnp.allclose(out, ref_bf16, atol=2e-3, rtol=2e-3)
    assert jnp.allclose(out, ref_f32, atol=1e-1, rtol=1e-1)

    # 2) Forced-tiling config: T tiled (80 = 32+32+16, masked boundary), V tiled
    #    (300 = 128+128+44, masked boundary), joint scratch reused across V tiles.
    out_tiled = jax.block_until_ready(
        rnnt_joiner(source, target, weight_dv, bias, max_rows=256, tile_v_cap=128))
    assert out_tiled.shape == (B, T, U, V)
    assert jnp.allclose(out_tiled, ref_bf16, atol=2e-3, rtol=2e-3)

    print("KERNEL_OK")
</pallas_src>

<mosaic_0001>
module attributes {stable_mosaic.version = 11 : i64} {
  func.func @_joiner_kernel(%arg0: i32, %arg1: i32, %arg2: i32, %arg3: memref<1x80x128xf32, #tpu.memory_space<vmem>>, %arg4: memref<1x8x128xf32, #tpu.memory_space<vmem>>, %arg5: memref<128x300xbf16, #tpu.memory_space<vmem>>, %arg6: memref<1x300xf32, #tpu.memory_space<vmem>>, %arg7: memref<1x80x6x300xf32, #tpu.memory_space<vmem>>, %arg8: memref<640x128xbf16, #tpu.memory_space<vmem>>) attributes {dimension_semantics = [#tpu.dimension_semantics<parallel>, #tpu.dimension_semantics<parallel>, #tpu.dimension_semantics<parallel>], iteration_bounds = array<i64: 2, 1, 1>, scalar_prefetch = 0 : i64, scratch_operands = 1 : i64, tpu.core_type = #tpu.core_type<tc>, window_params = [{transform_indices = @transform_0, window_bounds = array<i64: 1, 80, 128>}, {transform_indices = @transform_1, window_bounds = array<i64: 1, 8, 128>}, {transform_indices = @transform_2, window_bounds = array<i64: 128, 300>}, {transform_indices = @transform_3, window_bounds = array<i64: 1, 300>}, {transform_indices = @transform_4, window_bounds = array<i64: 1, 80, 6, 300>}]} {
    %c0_i32 = arith.constant 0 : i32
    %0 = arith.cmpi eq, %arg2, %c0_i32 : i32
    %1 = arith.extui %0 : i1 to i32
    %c0_i32_0 = arith.constant 0 : i32
    %2 = arith.cmpi ne, %1, %c0_i32_0 : i32
    scf.if %2 {
      %c0_10 = arith.constant 0 : index
      %c0_11 = arith.constant 0 : index
      %c0_12 = arith.constant 0 : index
      %14 = vector.load %arg3[%c0_10, %c0_11, %c0_12] : memref<1x80x128xf32, #tpu.memory_space<vmem>>, vector<1x80x128xf32>
      %15 = vector.shape_cast %14 : vector<1x80x128xf32> to vector<80x128xf32>
      %16 = vector.shape_cast %15 : vector<80x128xf32> to vector<80x1x128xf32>
      %c0_13 = arith.constant 0 : index
      %c0_14 = arith.constant 0 : index
      %c0_15 = arith.constant 0 : index
      %17 = vector.load %arg4[%c0_13, %c0_14, %c0_15] : memref<1x8x128xf32, #tpu.memory_space<vmem>>, vector<1x8x128xf32>
      %18 = vector.shape_cast %17 : vector<1x8x128xf32> to vector<8x128xf32>
      %19 = vector.shape_cast %18 : vector<8x128xf32> to vector<1x8x128xf32>
      %20 = vector.broadcast %16 : vector<80x1x128xf32> to vector<80x8x128xf32>
      %21 = vector.broadcast %19 : vector<1x8x128xf32> to vector<80x8x128xf32>
      %22 = arith.addf %20, %21 : vector<80x8x128xf32>
      %23 = vector.shape_cast %22 : vector<80x8x128xf32> to vector<640x128xf32>
      %24 = arith.truncf %23 : vector<640x128xf32> to vector<640x128xbf16>
      %cst_16 = arith.constant 0.000000e+00 : bf16
      %25 = vector.broadcast %cst_16 : bf16 to vector<640x128xbf16>
      %26 = arith.maximumf %24, %25 : vector<640x128xbf16>
      %c0_17 = arith.constant 0 : index
      %c0_18 = arith.constant 0 : index
      %27 = vector.load %arg8[%c0_17, %c0_18] : memref<640x128xbf16, #tpu.memory_space<vmem>>, vector<640x128xbf16>
      tpu.vector_store %arg8[%c0_17, %c0_18], %26 {strides = array<i32>} : memref<640x128xbf16, #tpu.memory_space<vmem>>, vector<640x128xbf16>,
    } else {
    }
    %c0 = arith.constant 0 : index
    %c0_1 = arith.constant 0 : index
    %3 = vector.load %arg8[%c0, %c0_1] : memref<640x128xbf16, #tpu.memory_space<vmem>>, vector<640x128xbf16>
    %c0_2 = arith.constant 0 : index
    %c0_3 = arith.constant 0 : index
    %4 = vector.load %arg5[%c0_2, %c0_3] : memref<128x300xbf16, #tpu.memory_space<vmem>>, vector<128x300xbf16>
    %cst = arith.constant dense<0.000000e+00> : vector<640x300xf32>
    %5 = tpu.matmul %3, %4, %cst {dimension_numbers = #tpu.dot_dimension_numbers<[1], [0], [0], [1], [0, 0, 1, 1], [], []>} : vector<640x128xbf16>, vector<128x300xbf16>, vector<640x300xf32> -> vector<640x300xf32>
    %c0_4 = arith.constant 0 : index
    %c0_5 = arith.constant 0 : index
    %6 = vector.load %arg6[%c0_4, %c0_5] : memref<1x300xf32, #tpu.memory_space<vmem>>, vector<1x300xf32>
    %7 = vector.broadcast %6 : vector<1x300xf32> to vector<640x300xf32>
    %8 = arith.addf %5, %7 : vector<640x300xf32>
    %9 = vector.shape_cast %8 : vector<640x300xf32> to vector<80x8x300xf32>
    %10 = vector.extract_strided_slice %9 {offsets = [0, 0, 0], sizes = [80, 6, 300], strides = [1, 1, 1]} : vector<80x8x300xf32> to vector<80x6x300xf32>
    %c0_6 = arith.constant 0 : index
    %c0_7 = arith.constant 0 : index
    %c0_8 = arith.constant 0 : index
    %c0_9 = arith.constant 0 : index
    %11 = vector.load %arg7[%c0_6, %c0_7, %c0_8, %c0_9] : memref<1x80x6x300xf32, #tpu.memory_space<vmem>>, vector<1x80x6x300xf32>
    %12 = vector.shape_cast %11 : vector<1x80x6x300xf32> to vector<80x6x300xf32>
    %13 = vector.shape_cast %10 : vector<80x6x300xf32> to vector<1x80x6x300xf32>
    tpu.vector_store %arg7[%c0_6, %c0_7, %c0_8, %c0_9], %13 {strides = array<i32>} : memref<1x80x6x300xf32, #tpu.memory_space<vmem>>, vector<1x80x6x300xf32>,
    return
  }
  func.func @transform_0(%arg0: i32, %arg1: i32, %arg2: i32) -> (i32, i32, i32) {
    %c0_i32 = arith.constant 0 : i32
    %c0_i32_0 = arith.constant 0 : i32
    return %arg0, %arg1, %c0_i32 : i32, i32, i32
  }
  func.func @transform_1(%arg0: i32, %arg1: i32, %arg2: i32) -> (i32, i32, i32) {
    %c0_i32 = arith.constant 0 : i32
    %c0_i32_0 = arith.constant 0 : i32
    %c0_i32_1 = arith.constant 0 : i32
    return %arg0, %c0_i32, %c0_i32_0 : i32, i32, i32
  }
  func.func @transform_2(%arg0: i32, %arg1: i32, %arg2: i32) -> (i32, i32) {
    %c0_i32 = arith.constant 0 : i32
    %c0_i32_0 = arith.constant 0 : i32
    return %c0_i32, %arg2 : i32, i32
  }
  func.func @transform_3(%arg0: i32, %arg1: i32, %arg2: i32) -> (i32, i32) {
    %c0_i32 = arith.constant 0 : i32
    %c0_i32_0 = arith.constant 0 : i32
    return %c0_i32, %arg2 : i32, i32
  }
  func.func @transform_4(%arg0: i32, %arg1: i32, %arg2: i32) -> (i32, i32, i32, i32) {
    %c0_i32 = arith.constant 0 : i32
    %c0_i32_0 = arith.constant 0 : i32
    return %arg0, %arg1, %c0_i32, %arg2 : i32, i32, i32, i32
  }
}

</mosaic_0001>

<llo_original>
// kernel: tpu_custom_call.1
$region0: #{tpu_custom_call.1}
  #allocation0 [shape = 'u32[]', space=smem, size = 0x4, offset = 0x4, fixed_abs, tag = 'smem constant byte address 0x4 - core index']
  #allocation1 [shape = 'u32[144,128]{1,0:T(1,128)}', space=vmem, size = 0x12000, scoped, tag = 'internal scratch']
  #allocation2 [shape = 'bf16[640,128]{1,0:T(16,128)(2,1)}', space=vmem, size = 0x28000, scoped, tag = 'scratch operand']
  %s0 = inlined_call_operand.hbm [shape: f32[2,80,128], index: 0, kind: input, shape index: {}]
  %s1 = inlined_call_operand.hbm [shape: f32[2,8,128], index: 1, kind: input, shape index: {}]
  %s2 = inlined_call_operand.vmem [shape: bf16[128,300], index: 2, kind: input, shape index: {}]
  %s3 = inlined_call_operand.hbm [shape: f32[1,300], index: 3, kind: input, shape index: {}]
  %s4 = inlined_call_operand.vmem [shape: f32[2,80,6,300], index: 4, kind: output, shape index: {}]
  %s5 = sld [smem:[#allocation0]]
  $region65: #{tpu_custom_call.1} parent=0
    _
  %s7 = ssub.s32 1, %s5
  %s8 = scalar_select 0, %s7, %s5
  $region1: #{tpu_custom_call.1} parent=0
    #allocation3 [shape = 'u8[81920]{0}', space=vmem, size = 0x14000, scoped, tag = 'input window, operand 0']
    #allocation4 [shape = 's32[2]{0}', space=sflag, size = 0x8, scoped, tag = 'scoped memory for tpu_custom_call.1']
    #allocation5 [shape = 'u8[8192]{0}', space=vmem, size = 0x2000, scoped, tag = 'input window, operand 1']
    #allocation6 [shape = 's32[2]{0}', space=sflag, size = 0x8, scoped, tag = 'scoped memory for tpu_custom_call.1']
    #allocation7 [shape = 'u8[1536]{0}', space=vmem, size = 0x800, scoped, tag = 'input window, operand 3, single buffered']
    %9 = vsyncpa [#allocation4], 0
    %s10 = scalar_lea.sflag [#allocation4], 1
    %11 = vsyncpa %s10, 0
    %12 = vsyncpa [#allocation6], 0
    %s13 = scalar_lea.sflag [#allocation6], 1
    %14 = vsyncpa %s13, 0
    loop: start=0, step=1, limit=4
    $region2: #{tpu_custom_call.1} parent=1 // loop_pre_header
      _
    $region3: #{tpu_custom_call.1} parent=1 // loop_header
      %s16 = sphi 0, %s20
      %p17 = scmp.ge.s32.totalorder %s16, 4
      %s23 = sphi 0, %s42
      %s24 = sphi 0, %s38
      %s25 = sphi 0, %s34
      %s26 = sphi 0, %s23
      %s27 = sphi 0, %s24
      %s28 = sphi 0, %s25
      %s29 = sphi 0, %s26
      %s30 = sphi 0, %s27
      %s31 = sphi 0, %s28
      %s47 = sphi 0, %s49
      %s50 = sphi 0, %s47
      %s51 = sphi 0, %s50
      %s67 = sphi 0, %s51
      %s73 = sphi 0, %s75
      %s76 = sphi 0, %s73
      %s77 = sphi 0, %s76
      %s93 = sphi 0, %s77
      %s99 = sphi 0, %s101
      %s102 = sphi 0, %s99
      %s103 = sphi 0, %s102
      %s119 = sphi 0, %s103
      %s125 = sphi 0, %s127
      %s128 = sphi 0, %s125
      %s129 = sphi 0, %s128
      %s145 = sphi 0, %s129
      %s155 = sphi 0, %s157
      %s158 = sphi 0, %s155
      %s159 = sphi 0, %s158
      %s175 = sphi 0, %s159
    $region4: #{tpu_custom_call.1} parent=1 // loop_header_branch
      %19 = sbr.rel (%p17) target = $region8
    $region5: #{tpu_custom_call.1} parent=1 // loop_body
      %s21 = ssub.s32 %s16, 1
      %s22 = ssub.s32 %s16, 2
      %s32 = sadd.s32 1, %s25
      %p33 = scmp.ge.s32.totalorder %s32, 1
      %s34 = scalar_select %p33, 0, %s32
      %s35 = sadd.s32 1, %s24
      %s36 = scalar_select %p33, %s35, %s24
      %p37 = scmp.ge.s32.totalorder %s36, 1
      %s38 = scalar_select %p37, 0, %s36
      %s39 = sadd.s32 1, %s23
      %s40 = scalar_select %p37, %s39, %s23
      %p41 = scmp.ge.s32.totalorder %s40, 2
      %s42 = scalar_select %p41, 0, %s40
      %s43 = ssub.s32 %s23, %s42
      %s44 = ssub.s32 %s24, %s38
      %s45 = sor.u32 %s43, %s44
      %p46 = scmp.eq.s32.totalorder %s45, 0
      %s48 = sadd.s32 %s47, 1
      %s49 = scalar_select %p46, %s47, %s48
      %p52 = pneg %p46
      %p53 = scmp.eq.s32.totalorder %s16, 1
      %p54 = por %p52, %p53
      %p55 = scmp.ne.s32.totalorder %s47, %s50
      %p56 = scmp.eq.s32.totalorder %s16, 0
      %p57 = por %p55, %p56
      %p58 = scmp.ne.s32.totalorder %s47, %s50
      %p59 = scmp.eq.s32.totalorder %s21, 1
      %p60 = por %p58, %p59
      %p61 = scmp.ne.s32.totalorder %s50, %s51
      %p62 = scmp.eq.s32.totalorder %s21, 0
      %p63 = por %p61, %p62
      %p64 = scmp.ne.s32.totalorder %s50, %s51
      %p65 = scmp.eq.s32.totalorder %s22, 1
      %p66 = por %p64, %p65
      %p68 = scmp.ne.s32.totalorder %s51, %s67
      %p69 = scmp.eq.s32.totalorder %s22, 0
      %p70 = por %p68, %p69
      %s71 = ssub.s32 %s23, %s42
      %p72 = scmp.eq.s32.totalorder %s71, 0
      %s74 = sadd.s32 %s73, 1
      %s75 = scalar_select %p72, %s73, %s74
      %p78 = pneg %p72
      %p79 = scmp.eq.s32.totalorder %s16, 1
      %p80 = por %p78, %p79
      %p81 = scmp.ne.s32.totalorder %s73, %s76
      %p82 = scmp.eq.s32.totalorder %s16, 0
      %p83 = por %p81, %p82
      %p84 = scmp.ne.s32.totalorder %s73, %s76
      %p85 = scmp.eq.s32.totalorder %s21, 1
      %p86 = por %p84, %p85
      %p87 = scmp.ne.s32.totalorder %s76, %s77
      %p88 = scmp.eq.s32.totalorder %s21, 0
      %p89 = por %p87, %p88
      %p90 = scmp.ne.s32.totalorder %s76, %s77
      %p91 = scmp.eq.s32.totalorder %s22, 1
      %p92 = por %p90, %p91
      %p94 = scmp.ne.s32.totalorder %s77, %s93
      %p95 = scmp.eq.s32.totalorder %s22, 0
      %p96 = por %p94, %p95
      %s97 = ssub.s32 %s25, %s34
      %p98 = scmp.eq.s32.totalorder %s97, 0
      %s100 = sadd.s32 %s99, 1
      %s101 = scalar_select %p98, %s99, %s100
      %p104 = pneg %p98
      %p105 = scmp.eq.s32.totalorder %s16, 1
      %p106 = por %p104, %p105
      %p107 = scmp.ne.s32.totalorder %s99, %s102
      %p108 = scmp.eq.s32.totalorder %s16, 0
      %p109 = por %p107, %p108
      %p110 = scmp.ne.s32.totalorder %s99, %s102
      %p111 = scmp.eq.s32.totalorder %s21, 1
      %p112 = por %p110, %p111
      %p113 = scmp.ne.s32.totalorder %s102, %s103
      %p114 = scmp.eq.s32.totalorder %s21, 0
      %p115 = por %p113, %p114
      %p116 = scmp.ne.s32.totalorder %s102, %s103
      %p117 = scmp.eq.s32.totalorder %s22, 1
      %p118 = por %p116, %p117
      %p120 = scmp.ne.s32.totalorder %s103, %s119
      %p121 = scmp.eq.s32.totalorder %s22, 0
      %p122 = por %p120, %p121
      %s123 = ssub.s32 %s25, %s34
      %p124 = scmp.eq.s32.totalorder %s123, 0
      %s126 = sadd.s32 %s125, 1
      %s127 = scalar_select %p124, %s125, %s126
      %p130 = pneg %p124
      %p131 = scmp.eq.s32.totalorder %s16, 1
      %p132 = por %p130, %p131
      %p133 = scmp.ne.s32.totalorder %s125, %s128
      %p134 = scmp.eq.s32.totalorder %s16, 0
      %p135 = por %p133, %p134
      %p136 = scmp.ne.s32.totalorder %s125, %s128
      %p137 = scmp.eq.s32.totalorder %s21, 1
      %p138 = por %p136, %p137
      %p139 = scmp.ne.s32.totalorder %s128, %s129
      %p140 = scmp.eq.s32.totalorder %s21, 0
      %p141 = por %p139, %p140
      %p142 = scmp.ne.s32.totalorder %s128, %s129
      %p143 = scmp.eq.s32.totalorder %s22, 1
      %p144 = por %p142, %p143
      %p146 = scmp.ne.s32.totalorder %s129, %s145
      %p147 = scmp.eq.s32.totalorder %s22, 0
      %p148 = por %p146, %p147
      %s149 = ssub.s32 %s23, %s42
      %s150 = ssub.s32 %s24, %s38
      %s151 = sor.u32 %s149, %s150
      %s152 = ssub.s32 %s25, %s34
      %s153 = sor.u32 %s151, %s152
      %p154 = scmp.eq.s32.totalorder %s153, 0
      %s156 = sadd.s32 %s155, 1
      %s157 = scalar_select %p154, %s155, %s156
      %p160 = pneg %p154
      %p161 = scmp.eq.s32.totalorder %s16, 1
      %p162 = por %p160, %p161
      %p163 = scmp.ne.s32.totalorder %s155, %s158
      %p164 = scmp.eq.s32.totalorder %s16, 0
      %p165 = por %p163, %p164
      %p166 = scmp.ne.s32.totalorder %s155, %s158
      %p167 = scmp.eq.s32.totalorder %s21, 1
      %p168 = por %p166, %p167
      %p169 = scmp.ne.s32.totalorder %s158, %s159
      %p170 = scmp.eq.s32.totalorder %s21, 0
      %p171 = por %p169, %p170
      %p172 = scmp.ne.s32.totalorder %s158, %s159
      %p173 = scmp.eq.s32.totalorder %s22, 1
      %p174 = por %p172, %p173
      %p176 = scmp.ne.s32.totalorder %s159, %s175
      %p177 = scmp.eq.s32.totalorder %s22, 0
      %p178 = por %p176, %p177
      %p179 = scmp.le.s32.totalorder 1, %s16
      %p180 = scmp.lt.s32.totalorder %s16, 3
      %p181 = pnand %p179, %p180
      %p182 = pneg %p181
      // Predicated region
      $region9: #{tpu_custom_call.1} parent=5 // pred_check
        _
      $region10: #{tpu_custom_call.1} parent=5 // pred_check_branch
        %184 = sbr.rel (%p181) target = $region12
      $region11: #{tpu_custom_call.1} parent=5 // pred_region
        %s185 = ssub.s32 %s16, 1
        // Predicated region
        $region13: #{tpu_custom_call.1} parent=11 // pred_check
          %p186 = pneg %p115
        $region14: #{tpu_custom_call.1} parent=11 // pred_check_branch
          %188 = sbr.rel (%p186) target = $region16
        $region15: #{tpu_custom_call.1} parent=11 // pred_region
          %s189 = smul.u32 3, %s28
          %p190 = scmp.lt.s32.totalorder %s189, 2
          %s191 = scalar_select %p190, %s189, 2
          %s192 = smul.addr %s191, 4
          %s193 = scalar_lea.vmem %s2, %s192
          %s194 = smul.u32 3, %s28
        $region16: #{tpu_custom_call.1} parent=11 // pred_fallthru
          _
        // Predicated region
        $region17: #{tpu_custom_call.1} parent=11 // pred_check
          %p195 = pneg %p141
        $region18: #{tpu_custom_call.1} parent=11 // pred_check_branch
          %197 = sbr.rel (%p195) target = $region20
        $region19: #{tpu_custom_call.1} parent=11 // pred_region
          %s198 = smul.u32 3, %s28
          %s200 = ssub.s32 48, 48
          %201 = vsyncadd [#allocation6], %s200
          %s202 = smul.addr %s198, 16
          %s203 = scalar_lea.hbm %s3, %s202
          %s205 = sshll.u32 [#allocation7], 4
          %s206 = int_to_ptr.vmem [resolvable:$true] %s205
          %208 = dma.hbm_to_vmem [thread:$0]  %s203, 48, %s206, [#allocation6]
        $region20: #{tpu_custom_call.1} parent=11 // pred_fallthru
          _
      $region12: #{tpu_custom_call.1} parent=5 // pred_fallthru
        _
      %p209 = scmp.lt.s32.totalorder %s16, 2
      // Predicated region
      $region21: #{tpu_custom_call.1} parent=5 // pred_check
        %p210 = pneg %p209
      $region22: #{tpu_custom_call.1} parent=5 // pred_check_branch
        %212 = sbr.rel (%p210) target = $region24
      $region23: #{tpu_custom_call.1} parent=5 // pred_region
        // Predicated region
        $region25: #{tpu_custom_call.1} parent=23 // pred_check
          %p213 = pneg %p57
        $region26: #{tpu_custom_call.1} parent=23 // pred_check_branch
          %215 = sbr.rel (%p213) target = $region28
        $region27: #{tpu_custom_call.1} parent=23 // pred_region
          %s216 = sand.u32 %s47, 1
          %s217 = scalar_lea.sflag [#allocation4], %s216
          %s218 = sand.u32 %s47, 1
          %s219 = smul.addr %s218, 80
          %s220 = scalar_lea.vmem [#allocation3], %s219
          %s221 = smul.u32 10, %s24
          %s223 = ssub.s32 1280, 1280
          %224 = vsyncadd %s217, %s223
          %s225 = smul.addr %s23, 10
          %s226 = sadd.s32 %s221, %s225
          %s227 = smul.addr %s226, 128
          %s228 = scalar_lea.hbm %s0, %s227
          %s229 = sshll.u32 %s220, 4
          %s230 = int_to_ptr.vmem [resolvable:$true] %s229
          %235 = dma.hbm_to_vmem [thread:$0]  %s228, 1280, %s230, %s217, 128, 128, 8
        $region28: #{tpu_custom_call.1} parent=23 // pred_fallthru
          _
        // Predicated region
        $region29: #{tpu_custom_call.1} parent=23 // pred_check
          %p236 = pneg %p83
        $region30: #{tpu_custom_call.1} parent=23 // pred_check_branch
          %238 = sbr.rel (%p236) target = $region32
        $region31: #{tpu_custom_call.1} parent=23 // pred_region
          %s239 = sand.u32 %s16, 1
          %s240 = scalar_lea.sflag [#allocation6], %s239
          %s241 = sand.u32 %s73, 1
          %s242 = smul.addr %s241, 8
          %s243 = scalar_lea.vmem [#allocation5], %s242
          %s245 = ssub.s32 128, 128
          %246 = vsyncadd %s240, %s245
          %s247 = smul.addr %s23, 128
          %s248 = scalar_lea.hbm %s1, %s247
          %s250 = sshll.u32 %s243, 4
          %s251 = int_to_ptr.vmem [resolvable:$true] %s250
          %253 = dma.hbm_to_vmem [thread:$0]  %s248, 128, %s251, %s240
        $region32: #{tpu_custom_call.1} parent=23 // pred_fallthru
          _
      $region24: #{tpu_custom_call.1} parent=5 // pred_fallthru
        _
      %p254 = scmp.le.s32.totalorder 1, %s16
      %p255 = scmp.lt.s32.totalorder %s16, 3
      %p256 = pnand %p254, %p255
      %p257 = pneg %p256
      // Predicated region
      $region33: #{tpu_custom_call.1} parent=5 // pred_check
        _
      $region34: #{tpu_custom_call.1} parent=5 // pred_check_branch
        %259 = sbr.rel (%p256) target = $region36
      $region35: #{tpu_custom_call.1} parent=5 // pred_region
        %s260 = ssub.s32 %s16, 1
        %s261 = sand.u32 %s50, 1
        %s262 = scalar_lea.sflag [#allocation4], %s261
        %s263 = sand.u32 %s50, 1
        %s264 = smul.addr %s263, 80
        %s265 = scalar_lea.vmem [#allocation3], %s264
        // Predicated region
        $region37: #{tpu_custom_call.1} parent=35 // pred_check
          %p266 = pneg %p63
        $region38: #{tpu_custom_call.1} parent=35 // pred_check_branch
          %268 = sbr.rel (%p266) target = $region40
        $region39: #{tpu_custom_call.1} parent=35 // pred_region
          %269 = dma.done %s262, 1280
        $region40: #{tpu_custom_call.1} parent=35 // pred_fallthru
          _
        %s270 = sand.u32 %s21, 1
        %s271 = scalar_lea.sflag [#allocation6], %s270
        %s272 = sand.u32 %s76, 1
        %s273 = smul.addr %s272, 8
        %s274 = scalar_lea.vmem [#allocation5], %s273
        // Predicated region
        $region41: #{tpu_custom_call.1} parent=35 // pred_check
          %p275 = pneg %p89
        $region42: #{tpu_custom_call.1} parent=35 // pred_check_branch
          %277 = sbr.rel (%p275) target = $region44
        $region43: #{tpu_custom_call.1} parent=35 // pred_region
          %278 = dma.done %s271, 128
        $region44: #{tpu_custom_call.1} parent=35 // pred_fallthru
          _
        // Predicated region
        $region45: #{tpu_custom_call.1} parent=35 // pred_check
          %p279 = pneg %p141
        $region46: #{tpu_custom_call.1} parent=35 // pred_check_branch
          %281 = sbr.rel (%p279) target = $region48
        $region47: #{tpu_custom_call.1} parent=35 // pred_region
          %282 = dma.done [#allocation6], 48
        $region48: #{tpu_custom_call.1} parent=35 // pred_fallthru
          _
        %s283 = sand.u32 %s50, 1
        %s284 = scalar_lea.sflag [#allocation4], %s283
        %s285 = sand.u32 %s50, 1
        %s286 = smul.addr %s285, 80
        %s287 = scalar_lea.vmem [#allocation3], %s286
        %p288 = pneg %p63
        %p289 = pneg %p60
        %s290 = sand.u32 %s21, 1
        %s291 = scalar_lea.sflag [#allocation6], %s290
        %s292 = sand.u32 %s76, 1
        %s293 = smul.addr %s292, 8
        %s294 = scalar_lea.vmem [#allocation5], %s293
        %p295 = pneg %p89
        %p296 = pneg %p86
        %s297 = smul.u32 3, %s28
        %p298 = scmp.lt.s32.totalorder %s297, 2
        %s299 = scalar_select %p298, %s297, 2
        %s300 = smul.addr %s299, 4
        %s301 = scalar_lea.vmem %s2, %s300
        %p302 = pneg %p115
        %p303 = pneg %p112
        %p304 = pneg %p141
        %p305 = pneg %p138
        %p306 = pneg %p171
        %p307 = pneg %p168
        %s308 = smul.u32 80, %s27
        %s309 = smul.u32 3, %s28
        %p310 = scmp.lt.s32.totalorder %s26, 1
        %s311 = scalar_select %p310, %s26, 1
        %p312 = scmp.lt.s32.totalorder %s308, 79
        %s313 = scalar_select %p312, %s308, 79
        %p314 = scmp.lt.s32.totalorder %s309, 2
        %s315 = scalar_select %p314, %s309, 2
        %s316 = smul.addr %s313, 3
        %s317 = sadd.s32 %s315, %s316
        %s318 = smul.addr %s311, 240
        %s319 = sadd.s32 %s317, %s318
        %s320 = smul.addr %s319, 8
        %s321 = scalar_lea.vmem %s4, %s320
        %s322 = smul.u32 10, %s27
        %s323 = smul.u32 3, %s28
        %p324 = scmp.lt.s32.totalorder %s323, 2
        %s325 = scalar_select %p324, %s323, 2
        %s326 = smul.addr %s325, 4
        %s327 = scalar_lea.vmem %s2, %s326
        %s328 = smul.u32 3, %s28
        %s329 = smul.u32 3, %s28
        %s330 = smul.u32 80, %s27
        %s331 = smul.u32 3, %s28
        %p332 = scmp.lt.s32.totalorder %s26, 1
        %s333 = scalar_select %p332, %s26, 1
        %p334 = scmp.lt.s32.totalorder %s330, 79
        %s335 = scalar_select %p334, %s330, 79
        %p336 = scmp.lt.s32.totalorder %s331, 2
        %s337 = scalar_select %p336, %s331, 2
        %s338 = smul.addr %s335, 3
        %s339 = sadd.s32 %s337, %s338
        %s340 = smul.addr %s333, 240
        %s341 = sadd.s32 %s339, %s340
        %s342 = smul.addr %s341, 8
        %s343 = scalar_lea.vmem %s4, %s342
        %s344 = smul.u32 80, %s27
        %s345 = smul.u32 3, %s28
        %p347 = scmp.eq.s32.totalorder %s28, 0
        // Predicated region
        $region49: #{tpu_custom_call.1} parent=35 // pred_check
          %p348 = pneg %p347
        $region50: #{tpu_custom_call.1} parent=35 // pred_check_branch
          %350 = sbr.rel (%p348) target = $region52
        $region51: #{tpu_custom_call.1} parent=35 // pred_region
          %v351 = vld [vmem:[%s265] sm:$0xff]
          %v352 = vld [vmem:[%s265 + $0x8] sm:$0xff]
          %v353 = vld [vmem:[%s265 + $0x10] sm:$0xff]
          %v354 = vld [vmem:[%s265 + $0x18] sm:$0xff]
          %v355 = vld [vmem:[%s265 + $0x20] sm:$0xff]
          %v356 = vld [vmem:[%s265 + $0x28] sm:$0xff]
          %v357 = vld [vmem:[%s265 + $0x30] sm:$0xff]
          %v358 = vld [vmem:[%s265 + $0x38] sm:$0xff]
          %v359 = vld [vmem:[%s265 + $0x40] sm:$0xff]
          %v360 = vld [vmem:[%s265 + $0x48] sm:$0xff]
          %v371 = vcombine.high %v351, %v351
          %v373 = vunpack.c.l.s4 1966171168
          %v374 = vunpack.c.0.s8 %v373
          %v375 = vlaneseq
          %v376 = vshrl.u32 %v375, 7
          %v377 = vsub.s32 %v374, %v376
          %v378 = vrot.slane %v351, %v377
          %v380 = vunpack.c.l.s4 1966171168
          %v381 = vunpack.c.0.s8 %v380
          %v382 = vlaneseq
          %v383 = vshrl.u32 %v382, 7
          %v384 = vsub.s32 %v381, %v383
          %v385 = vrot.slane %v371, %v384
          %v386 = vcombine.high %v378, %v378
          %v387 = vcombine.high %v385, %v385
          %v389 = vunpack.c.l.s4 1966171168
          %v390 = vunpack.c.0.s8 %v389
          %v391 = vlaneseq
          %v392 = vshrl.u32 %v391, 7
          %v393 = vsub.s32 %v390, %v392
          %v394 = vrot.slane %v378, %v393
          %v396 = vunpack.c.l.s4 1966171168
          %v397 = vunpack.c.0.s8 %v396
          %v398 = vlaneseq
          %v399 = vshrl.u32 %v398, 7
          %v400 = vsub.s32 %v397, %v399
          %v401 = vrot.slane %v385, %v400
          %v403 = vunpack.c.l.s4 1966171168
          %v404 = vunpack.c.0.s8 %v403
          %v405 = vlaneseq
          %v406 = vshrl.u32 %v405, 7
          %v407 = vsub.s32 %v404, %v406
          %v408 = vrot.slane %v386, %v407
          %v410 = vunpack.c.l.s4 1966171168
          %v411 = vunpack.c.0.s8 %v410
          %v412 = vlaneseq
          %v413 = vshrl.u32 %v412, 7
          %v414 = vsub.s32 %v411, %v413
          %v415 = vrot.slane %v387, %v414
          %v416 = vcombine.high %v394, %v394
          %v417 = vcombine.high %v401, %v401
          %v418 = vcombine.high %v408, %v408
          %v419 = vcombine.high %v415, %v415
          %v420 = vcombine.high %v352, %v352
          %v422 = vunpack.c.l.s4 1966171168
          %v423 = vunpack.c.0.s8 %v422
          %v424 = vlaneseq
          %v425 = vshrl.u32 %v424, 7
          %v426 = vsub.s32 %v423, %v425
          %v427 = vrot.slane %v352, %v426
          %v429 = vunpack.c.l.s4 1966171168
          %v430 = vunpack.c.0.s8 %v429
          %v431 = vlaneseq
          %v432 = vshrl.u32 %v431, 7
          %v433 = vsub.s32 %v430, %v432
          %v434 = vrot.slane %v420, %v433
          %v435 = vcombine.high %v427, %v427
          %v436 = vcombine.high %v434, %v434
          %v438 = vunpack.c.l.s4 1966171168
          %v439 = vunpack.c.0.s8 %v438
          %v440 = vlaneseq
          %v441 = vshrl.u32 %v440, 7
          %v442 = vsub.s32 %v439, %v441
          %v443 = vrot.slane %v427, %v442
          %v445 = vunpack.c.l.s4 1966171168
          %v446 = vunpack.c.0.s8 %v445
          %v447 = vlaneseq
          %v448 = vshrl.u32 %v447, 7
          %v449 = vsub.s32 %v446, %v448
          %v450 = vrot.slane %v434, %v449
          %v452 = vunpack.c.l.s4 1966171168
          %v453 = vunpack.c.0.s8 %v452
          %v454 = vlaneseq
          %v455 = vshrl.u32 %v454, 7
          %v456 = vsub.s32 %v453, %v455
          %v457 = vrot.slane %v435, %v456
          %v459 = vunpack.c.l.s4 1966171168
          %v460 = vunpack.c.0.s8 %v459
          %v461 = vlaneseq
          %v462 = vshrl.u32 %v461, 7
          %v463 = vsub.s32 %v460, %v462
          %v464 = vrot.slane %v436, %v463
          %v465 = vcombine.high %v443, %v443
          %v466 = vcombine.high %v450, %v450
          %v467 = vcombine.high %v457, %v457
          %v468 = vcombine.high %v464, %v464
          %v469 = vcombine.high %v353, %v353
          %v471 = vunpack.c.l.s4 1966171168
          %v472 = vunpack.c.0.s8 %v471
          %v473 = vlaneseq
          %v474 = vshrl.u32 %v473, 7
          %v475 = vsub.s32 %v472, %v474
          %v476 = vrot.slane %v353, %v475
          %v478 = vunpack.c.l.s4 1966171168
          %v479 = vunpack.c.0.s8 %v478
          %v480 = vlaneseq
          %v481 = vshrl.u32 %v480, 7
          %v482 = vsub.s32 %v479, %v481
          %v483 = vrot.slane %v469, %v482
          %v484 = vcombine.high %v476, %v476
          %v485 = vcombine.high %v483, %v483
          %v487 = vunpack.c.l.s4 1966171168
          %v488 = vunpack.c.0.s8 %v487
          %v489 = vlaneseq
          %v490 = vshrl.u32 %v489, 7
          %v491 = vsub.s32 %v488, %v490
          %v492 = vrot.slane %v476, %v491
          %v494 = vunpack.c.l.s4 1966171168
          %v495 = vunpack.c.0.s8 %v494
          %v496 = vlaneseq
          %v497 = vshrl.u32 %v496, 7
          %v498 = vsub.s32 %v495, %v497
          %v499 = vrot.slane %v483, %v498
          %v501 = vunpack.c.l.s4 1966171168
          %v502 = vunpack.c.0.s8 %v501
          %v503 = vlaneseq
          %v504 = vshrl.u32 %v503, 7
          %v505 = vsub.s32 %v502, %v504
          %v506 = vrot.slane %v484, %v505
          %v508 = vunpack.c.l.s4 1966171168
          %v509 = vunpack.c.0.s8 %v508
          %v510 = vlaneseq
          %v511 = vshrl.u32 %v510, 7
          %v512 = vsub.s32 %v509, %v511
          %v513 = vrot.slane %v485, %v512
          %v514 = vcombine.high %v492, %v492
          %v515 = vcombine.high %v499, %v499
          %v516 = vcombine.high %v506, %v506
          %v517 = vcombine.high %v513, %v513
          %v518 = vcombine.high %v354, %v354
          %v520 = vunpack.c.l.s4 1966171168
          %v521 = vunpack.c.0.s8 %v520
          %v522 = vlaneseq
          %v523 = vshrl.u32 %v522, 7
          %v524 = vsub.s32 %v521, %v523
          %v525 = vrot.slane %v354, %v524
          %v527 = vunpack.c.l.s4 1966171168
          %v528 = vunpack.c.0.s8 %v527
          %v529 = vlaneseq
          %v530 = vshrl.u32 %v529, 7
          %v531 = vsub.s32 %v528, %v530
          %v532 = vrot.slane %v518, %v531
          %v533 = vcombine.high %v525, %v525
          %v534 = vcombine.high %v532, %v532
          %v536 = vunpack.c.l.s4 1966171168
          %v537 = vunpack.c.0.s8 %v536
          %v538 = vlaneseq
          %v539 = vshrl.u32 %v538, 7
          %v540 = vsub.s32 %v537, %v539
          %v541 = vrot.slane %v525, %v540
          %v543 = vunpack.c.l.s4 1966171168
          %v544 = vunpack.c.0.s8 %v543
          %v545 = vlaneseq
          %v546 = vshrl.u32 %v545, 7
          %v547 = vsub.s32 %v544, %v546
          %v548 = vrot.slane %v532, %v547
          %v550 = vunpack.c.l.s4 1966171168
          %v551 = vunpack.c.0.s8 %v550
          %v552 = vlaneseq
          %v553 = vshrl.u32 %v552, 7
          %v554 = vsub.s32 %v551, %v553
          %v555 = vrot.slane %v533, %v554
          %v557 = vunpack.c.l.s4 1966171168
          %v558 = vunpack.c.0.s8 %v557
          %v559 = vlaneseq
          %v560 = vshrl.u32 %v559, 7
          %v561 = vsub.s32 %v558, %v560
          %v562 = vrot.slane %v534, %v561
          %v563 = vcombine.high %v541, %v541
          %v564 = vcombine.high %v548, %v548
          %v565 = vcombine.high %v555, %v555
          %v566 = vcombine.high %v562, %v562
          %v567 = vcombine.high %v355, %v355
          %v569 = vunpack.c.l.s4 1966171168
          %v570 = vunpack.c.0.s8 %v569
          %v571 = vlaneseq
          %v572 = vshrl.u32 %v571, 7
          %v573 = vsub.s32 %v570, %v572
          %v574 = vrot.slane %v355, %v573
          %v576 = vunpack.c.l.s4 1966171168
          %v577 = vunpack.c.0.s8 %v576
          %v578 = vlaneseq
          %v579 = vshrl.u32 %v578, 7
          %v580 = vsub.s32 %v577, %v579
          %v581 = vrot.slane %v567, %v580
          %v582 = vcombine.high %v574, %v574
          %v583 = vcombine.high %v581, %v581
          %v585 = vunpack.c.l.s4 1966171168
          %v586 = vunpack.c.0.s8 %v585
          %v587 = vlaneseq
          %v588 = vshrl.u32 %v587, 7
          %v589 = vsub.s32 %v586, %v588
          %v590 = vrot.slane %v574, %v589
          %v592 = vunpack.c.l.s4 1966171168
          %v593 = vunpack.c.0.s8 %v592
          %v594 = vlaneseq
          %v595 = vshrl.u32 %v594, 7
          %v596 = vsub.s32 %v593, %v595
          %v597 = vrot.slane %v581, %v596
          %v599 = vunpack.c.l.s4 1966171168
          %v600 = vunpack.c.0.s8 %v599
          %v601 = vlaneseq
          %v602 = vshrl.u32 %v601, 7
          %v603 = vsub.s32 %v600, %v602
          %v604 = vrot.slane %v582, %v603
          %v606 = vunpack.c.l.s4 1966171168
          %v607 = vunpack.c.0.s8 %v606
          %v608 = vlaneseq
          %v609 = vshrl.u32 %v608, 7
          %v610 = vsub.s32 %v607, %v609
          %v611 = vrot.slane %v583, %v610
          %v612 = vcombine.high %v590, %v590
          %v613 = vcombine.high %v597, %v597
          %v614 = vcombine.high %v604, %v604
          %v615 = vcombine.high %v611, %v611
          %v616 = vcombine.high %v356, %v356
          %v618 = vunpack.c.l.s4 1966171168
          %v619 = vunpack.c.0.s8 %v618
          %v620 = vlaneseq
          %v621 = vshrl.u32 %v620, 7
          %v622 = vsub.s32 %v619, %v621
          %v623 = vrot.slane %v356, %v622
          %v625 = vunpack.c.l.s4 1966171168
          %v626 = vunpack.c.0.s8 %v625
          %v627 = vlaneseq
          %v628 = vshrl.u32 %v627, 7
          %v629 = vsub.s32 %v626, %v628
          %v630 = vrot.slane %v616, %v629
          %v631 = vcombine.high %v623, %v623
          %v632 = vcombine.high %v630, %v630
          %v634 = vunpack.c.l.s4 1966171168
          %v635 = vunpack.c.0.s8 %v634
          %v636 = vlaneseq
          %v637 = vshrl.u32 %v636, 7
          %v638 = vsub.s32 %v635, %v637
          %v639 = vrot.slane %v623, %v638
          %v641 = vunpack.c.l.s4 1966171168
          %v642 = vunpack.c.0.s8 %v641
          %v643 = vlaneseq
          %v644 = vshrl.u32 %v643, 7
          %v645 = vsub.s32 %v642, %v644
          %v646 = vrot.slane %v630, %v645
          %v648 = vunpack.c.l.s4 1966171168
          %v649 = vunpack.c.0.s8 %v648
          %v650 = vlaneseq
          %v651 = vshrl.u32 %v650, 7
          %v652 = vsub.s32 %v649, %v651
          %v653 = vrot.slane %v631, %v652
          %v655 = vunpack.c.l.s4 1966171168
          %v656 = vunpack.c.0.s8 %v655
          %v657 = vlaneseq
          %v658 = vshrl.u32 %v657, 7
          %v659 = vsub.s32 %v656, %v658
          %v660 = vrot.slane %v632, %v659
          %v661 = vcombine.high %v639, %v639
          %v662 = vcombine.high %v646, %v646
          %v663 = vcombine.high %v653, %v653
          %v664 = vcombine.high %v660, %v660
          %v665 = vcombine.high %v357, %v357
          %v667 = vunpack.c.l.s4 1966171168
          %v668 = vunpack.c.0.s8 %v667
          %v669 = vlaneseq
          %v670 = vshrl.u32 %v669, 7
          %v671 = vsub.s32 %v668, %v670
          %v672 = vrot.slane %v357, %v671
          %v674 = vunpack.c.l.s4 1966171168
          %v675 = vunpack.c.0.s8 %v674
          %v676 = vlaneseq
          %v677 = vshrl.u32 %v676, 7
          %v678 = vsub.s32 %v675, %v677
          %v679 = vrot.slane %v665, %v678
          %v680 = vcombine.high %v672, %v672
          %v681 = vcombine.high %v679, %v679
          %v683 = vunpack.c.l.s4 1966171168
          %v684 = vunpack.c.0.s8 %v683
          %v685 = vlaneseq
          %v686 = vshrl.u32 %v685, 7
          %v687 = vsub.s32 %v684, %v686
          %v688 = vrot.slane %v672, %v687
          %v690 = vunpack.c.l.s4 1966171168
          %v691 = vunpack.c.0.s8 %v690
          %v692 = vlaneseq
          %v693 = vshrl.u32 %v692, 7
          %v694 = vsub.s32 %v691, %v693
          %v695 = vrot.slane %v679, %v694
          %v697 = vunpack.c.l.s4 1966171168
          %v698 = vunpack.c.0.s8 %v697
          %v699 = vlaneseq
          %v700 = vshrl.u32 %v699, 7
          %v701 = vsub.s32 %v698, %v700
          %v702 = vrot.slane %v680, %v701
          %v704 = vunpack.c.l.s4 1966171168
          %v705 = vunpack.c.0.s8 %v704
          %v706 = vlaneseq
          %v707 = vshrl.u32 %v706, 7
          %v708 = vsub.s32 %v705, %v707
          %v709 = vrot.slane %v681, %v708
          %v710 = vcombine.high %v688, %v688
          %v711 = vcombine.high %v695, %v695
          %v712 = vcombine.high %v702, %v702
          %v713 = vcombine.high %v709, %v709
          %v714 = vcombine.high %v358, %v358
          %v716 = vunpack.c.l.s4 1966171168
          %v717 = vunpack.c.0.s8 %v716
          %v718 = vlaneseq
          %v719 = vshrl.u32 %v718, 7
          %v720 = vsub.s32 %v717, %v719
          %v721 = vrot.slane %v358, %v720
          %v723 = vunpack.c.l.s4 1966171168
          %v724 = vunpack.c.0.s8 %v723
          %v725 = vlaneseq
          %v726 = vshrl.u32 %v725, 7
          %v727 = vsub.s32 %v724, %v726
          %v728 = vrot.slane %v714, %v727
          %v729 = vcombine.high %v721, %v721
          %v730 = vcombine.high %v728, %v728
          %v732 = vunpack.c.l.s4 1966171168
          %v733 = vunpack.c.0.s8 %v732
          %v734 = vlaneseq
          %v735 = vshrl.u32 %v734, 7
          %v736 = vsub.s32 %v733, %v735
          %v737 = vrot.slane %v721, %v736
          %v739 = vunpack.c.l.s4 1966171168
          %v740 = vunpack.c.0.s8 %v739
          %v741 = vlaneseq
          %v742 = vshrl.u32 %v741, 7
          %v743 = vsub.s32 %v740, %v742
          %v744 = vrot.slane %v728, %v743
          %v746 = vunpack.c.l.s4 1966171168
          %v747 = vunpack.c.0.s8 %v746
          %v748 = vlaneseq
          %v749 = vshrl.u32 %v748, 7
          %v750 = vsub.s32 %v747, %v749
          %v751 = vrot.slane %v729, %v750
          %v753 = vunpack.c.l.s4 1966171168
          %v754 = vunpack.c.0.s8 %v753
          %v755 = vlaneseq
          %v756 = vshrl.u32 %v755, 7
          %v757 = vsub.s32 %v754, %v756
          %v758 = vrot.slane %v730, %v757
          %v759 = vcombine.high %v737, %v737
          %v760 = vcombine.high %v744, %v744
          %v761 = vcombine.high %v751, %v751
          %v762 = vcombine.high %v758, %v758
          %v763 = vcombine.high %v359, %v359
          %v765 = vunpack.c.l.s4 1966171168
          %v766 = vunpack.c.0.s8 %v765
          %v767 = vlaneseq
          %v768 = vshrl.u32 %v767, 7
          %v769 = vsub.s32 %v766, %v768
          %v770 = vrot.slane %v359, %v769
          %v772 = vunpack.c.l.s4 1966171168
          %v773 = vunpack.c.0.s8 %v772
          %v774 = vlaneseq
          %v775 = vshrl.u32 %v774, 7
          %v776 = vsub.s32 %v773, %v775
          %v777 = vrot.slane %v763, %v776
          %v778 = vcombine.high %v770, %v770
          %v779 = vcombine.high %v777, %v777
          %v781 = vunpack.c.l.s4 1966171168
          %v782 = vunpack.c.0.s8 %v781
          %v783 = vlaneseq
          %v784 = vshrl.u32 %v783, 7
          %v785 = vsub.s32 %v782, %v784
          %v786 = vrot.slane %v770, %v785
          %v788 = vunpack.c.l.s4 1966171168
          %v789 = vunpack.c.0.s8 %v788
          %v790 = vlaneseq
          %v791 = vshrl.u32 %v790, 7
          %v792 = vsub.s32 %v789, %v791
          %v793 = vrot.slane %v777, %v792
          %v795 = vunpack.c.l.s4 1966171168
          %v796 = vunpack.c.0.s8 %v795
          %v797 = vlaneseq
          %v798 = vshrl.u32 %v797, 7
          %v799 = vsub.s32 %v796, %v798
          %v800 = vrot.slane %v778, %v799
          %v802 = vunpack.c.l.s4 1966171168
          %v803 = vunpack.c.0.s8 %v802
          %v804 = vlaneseq
          %v805 = vshrl.u32 %v804, 7
          %v806 = vsub.s32 %v803, %v805
          %v807 = vrot.slane %v779, %v806
          %v808 = vcombine.high %v786, %v786
          %v809 = vcombine.high %v793, %v793
          %v810 = vcombine.high %v800, %v800
          %v811 = vcombine.high %v807, %v807
          %v812 = vcombine.high %v360, %v360
          %v814 = vunpack.c.l.s4 1966171168
          %v815 = vunpack.c.0.s8 %v814
          %v816 = vlaneseq
          %v817 = vshrl.u32 %v816, 7
          %v818 = vsub.s32 %v815, %v817
          %v819 = vrot.slane %v360, %v818
          %v821 = vunpack.c.l.s4 1966171168
          %v822 = vunpack.c.0.s8 %v821
          %v823 = vlaneseq
          %v824 = vshrl.u32 %v823, 7
          %v825 = vsub.s32 %v822, %v824
          %v826 = vrot.slane %v812, %v825
          %v827 = vcombine.high %v819, %v819
          %v828 = vcombine.high %v826, %v826
          %v830 = vunpack.c.l.s4 1966171168
          %v831 = vunpack.c.0.s8 %v830
          %v832 = vlaneseq
          %v833 = vshrl.u32 %v832, 7
          %v834 = vsub.s32 %v831, %v833
          %v835 = vrot.slane %v819, %v834
          %v837 = vunpack.c.l.s4 1966171168
          %v838 = vunpack.c.0.s8 %v837
          %v839 = vlaneseq
          %v840 = vshrl.u32 %v839, 7
          %v841 = vsub.s32 %v838, %v840
          %v842 = vrot.slane %v826, %v841
          %v844 = vunpack.c.l.s4 1966171168
          %v845 = vunpack.c.0.s8 %v844
          %v846 = vlaneseq
          %v847 = vshrl.u32 %v846, 7
          %v848 = vsub.s32 %v845, %v847
          %v849 = vrot.slane %v827, %v848
          %v851 = vunpack.c.l.s4 1966171168
          %v852 = vunpack.c.0.s8 %v851
          %v853 = vlaneseq
          %v854 = vshrl.u32 %v853, 7
          %v855 = vsub.s32 %v852, %v854
          %v856 = vrot.slane %v828, %v855
          %v857 = vcombine.high %v835, %v835
          %v858 = vcombine.high %v842, %v842
          %v859 = vcombine.high %v849, %v849
          %v860 = vcombine.high %v856, %v856
          %v861 = vld [vmem:[%s274] sm:$0xff]
          %v862 = vlaneseq
          %v863 = vshrl.u32 %v862, 7
          %v864 = vsub.s32 0, %v863
          %v865 = vrot.slane %v394, %v864
          %v866 = vlaneseq
          %v867 = vshrl.u32 %v866, 7
          %v868 = vsub.s32 0, %v867
          %v869 = vrot.slane %v408, %v868
          %v870 = vlaneseq
          %v871 = vshrl.u32 %v870, 7
          %v872 = vsub.s32 0, %v871
          %v873 = vrot.slane %v416, %v872
          %v874 = vlaneseq
          %v875 = vshrl.u32 %v874, 7
          %v876 = vsub.s32 0, %v875
          %v877 = vrot.slane %v418, %v876
          %v878 = vlaneseq
          %v879 = vshrl.u32 %v878, 7
          %v880 = vsub.s32 0, %v879
          %v881 = vrot.slane %v401, %v880
          %v882 = vlaneseq
          %v883 = vshrl.u32 %v882, 7
          %v884 = vsub.s32 0, %v883
          %v885 = vrot.slane %v415, %v884
          %v886 = vlaneseq
          %v887 = vshrl.u32 %v886, 7
          %v888 = vsub.s32 0, %v887
          %v889 = vrot.slane %v417, %v888
          %v890 = vlaneseq
          %v891 = vshrl.u32 %v890, 7
          %v892 = vsub.s32 0, %v891
          %v893 = vrot.slane %v419, %v892
          %v894 = vlaneseq
          %v895 = vshrl.u32 %v894, 7
          %v896 = vsub.s32 0, %v895
          %v897 = vrot.slane %v443, %v896
          %v898 = vlaneseq
          %v899 = vshrl.u32 %v898, 7
          %v900 = vsub.s32 0, %v899
          %v901 = vrot.slane %v457, %v900
          %v902 = vlaneseq
          %v903 = vshrl.u32 %v902, 7
          %v904 = vsub.s32 0, %v903
          %v905 = vrot.slane %v465, %v904
          %v906 = vlaneseq
          %v907 = vshrl.u32 %v906, 7
          %v908 = vsub.s32 0, %v907
          %v909 = vrot.slane %v467, %v908
          %v910 = vlaneseq
          %v911 = vshrl.u32 %v910, 7
          %v912 = vsub.s32 0, %v911
          %v913 = vrot.slane %v450, %v912
          %v914 = vlaneseq
          %v915 = vshrl.u32 %v914, 7
          %v916 = vsub.s32 0, %v915
          %v917 = vrot.slane %v464, %v916
          %v918 = vlaneseq
          %v919 = vshrl.u32 %v918, 7
          %v920 = vsub.s32 0, %v919
          %v921 = vrot.slane %v466, %v920
          %v922 = vlaneseq
          %v923 = vshrl.u32 %v922, 7
          %v924 = vsub.s32 0, %v923
          %v925 = vrot.slane %v468, %v924
          %v926 = vlaneseq
          %v927 = vshrl.u32 %v926, 7
          %v928 = vsub.s32 0, %v927
          %v929 = vrot.slane %v492, %v928
          %v930 = vlaneseq
          %v931 = vshrl.u32 %v930, 7
          %v932 = vsub.s32 0, %v931
          %v933 = vrot.slane %v506, %v932
          %v934 = vlaneseq
          %v935 = vshrl.u32 %v934, 7
          %v936 = vsub.s32 0, %v935
          %v937 = vrot.slane %v514, %v936
          %v938 = vlaneseq
          %v939 = vshrl.u32 %v938, 7
          %v940 = vsub.s32 0, %v939
          %v941 = vrot.slane %v516, %v940
          %v942 = vlaneseq
          %v943 = vshrl.u32 %v942, 7
          %v944 = vsub.s32 0, %v943
          %v945 = vrot.slane %v499, %v944
          %v946 = vlaneseq
          %v947 = vshrl.u32 %v946, 7
          %v948 = vsub.s32 0, %v947
          %v949 = vrot.slane %v513, %v948
          %v950 = vlaneseq
          %v951 = vshrl.u32 %v950, 7
          %v952 = vsub.s32 0, %v951
          %v953 = vrot.slane %v515, %v952
          %v954 = vlaneseq
          %v955 = vshrl.u32 %v954, 7
          %v956 = vsub.s32 0, %v955
          %v957 = vrot.slane %v517, %v956
          %v958 = vlaneseq
          %v959 = vshrl.u32 %v958, 7
          %v960 = vsub.s32 0, %v959
          %v961 = vrot.slane %v541, %v960
          %v962 = vlaneseq
          %v963 = vshrl.u32 %v962, 7
          %v964 = vsub.s32 0, %v963
          %v965 = vrot.slane %v555, %v964
          %v966 = vlaneseq
          %v967 = vshrl.u32 %v966, 7
          %v968 = vsub.s32 0, %v967
          %v969 = vrot.slane %v563, %v968
          %v970 = vlaneseq
          %v971 = vshrl.u32 %v970, 7
          %v972 = vsub.s32 0, %v971
          %v973 = vrot.slane %v565, %v972
          %v974 = vlaneseq
          %v975 = vshrl.u32 %v974, 7
          %v976 = vsub.s32 0, %v975
          %v977 = vrot.slane %v548, %v976
          %v978 = vlaneseq
          %v979 = vshrl.u32 %v978, 7
          %v980 = vsub.s32 0, %v979
          %v981 = vrot.slane %v562, %v980
          %v982 = vlaneseq
          %v983 = vshrl.u32 %v982, 7
          %v984 = vsub.s32 0, %v983
          %v985 = vrot.slane %v564, %v984
          %v986 = vlaneseq
          %v987 = vshrl.u32 %v986, 7
          %v988 = vsub.s32 0, %v987
          %v989 = vrot.slane %v566, %v988
          %v990 = vlaneseq
          %v991 = vshrl.u32 %v990, 7
          %v992 = vsub.s32 0, %v991
          %v993 = vrot.slane %v590, %v992
          %v994 = vlaneseq
          %v995 = vshrl.u32 %v994, 7
          %v996 = vsub.s32 0, %v995
          %v997 = vrot.slane %v604, %v996
          %v998 = vlaneseq
          %v999 = vshrl.u32 %v998, 7
          %v1000 = vsub.s32 0, %v999
          %v1001 = vrot.slane %v612, %v1000
          %v1002 = vlaneseq
          %v1003 = vshrl.u32 %v1002, 7
          %v1004 = vsub.s32 0, %v1003
          %v1005 = vrot.slane %v614, %v1004
          %v1006 = vlaneseq
          %v1007 = vshrl.u32 %v1006, 7
          %v1008 = vsub.s32 0, %v1007
          %v1009 = vrot.slane %v597, %v1008
          %v1010 = vlaneseq
          %v1011 = vshrl.u32 %v1010, 7
          %v1012 = vsub.s32 0, %v1011
          %v1013 = vrot.slane %v611, %v1012
          %v1014 = vlaneseq
          %v1015 = vshrl.u32 %v1014, 7
          %v1016 = vsub.s32 0, %v1015
          %v1017 = vrot.slane %v613, %v1016
          %v1018 = vlaneseq
          %v1019 = vshrl.u32 %v1018, 7
          %v1020 = vsub.s32 0, %v1019
          %v1021 = vrot.slane %v615, %v1020
          %v1022 = vlaneseq
          %v1023 = vshrl.u32 %v1022, 7
          %v1024 = vsub.s32 0, %v1023
          %v1025 = vrot.slane %v639, %v1024
          %v1026 = vlaneseq
          %v1027 = vshrl.u32 %v1026, 7
          %v1028 = vsub.s32 0, %v1027
          %v1029 = vrot.slane %v653, %v1028
          %v1030 = vlaneseq
          %v1031 = vshrl.u32 %v1030, 7
          %v1032 = vsub.s32 0, %v1031
          %v1033 = vrot.slane %v661, %v1032
          %v1034 = vlaneseq
          %v1035 = vshrl.u32 %v1034, 7
          %v1036 = vsub.s32 0, %v1035
          %v1037 = vrot.slane %v663, %v1036
          %v1038 = vlaneseq
          %v1039 = vshrl.u32 %v1038, 7
          %v1040 = vsub.s32 0, %v1039
          %v1041 = vrot.slane %v646, %v1040
          %v1042 = vlaneseq
          %v1043 = vshrl.u32 %v1042, 7
          %v1044 = vsub.s32 0, %v1043
          %v1045 = vrot.slane %v660, %v1044
          %v1046 = vlaneseq
          %v1047 = vshrl.u32 %v1046, 7
          %v1048 = vsub.s32 0, %v1047
          %v1049 = vrot.slane %v662, %v1048
          %v1050 = vlaneseq
          %v1051 = vshrl.u32 %v1050, 7
          %v1052 = vsub.s32 0, %v1051
          %v1053 = vrot.slane %v664, %v1052
          %v1054 = vlaneseq
          %v1055 = vshrl.u32 %v1054, 7
          %v1056 = vsub.s32 0, %v1055
          %v1057 = vrot.slane %v688, %v1056
          %v1058 = vlaneseq
          %v1059 = vshrl.u32 %v1058, 7
          %v1060 = vsub.s32 0, %v1059
          %v1061 = vrot.slane %v702, %v1060
          %v1062 = vlaneseq
          %v1063 = vshrl.u32 %v1062, 7
          %v1064 = vsub.s32 0, %v1063
          %v1065 = vrot.slane %v710, %v1064
          %v1066 = vlaneseq
          %v1067 = vshrl.u32 %v1066, 7
          %v1068 = vsub.s32 0, %v1067
          %v1069 = vrot.slane %v712, %v1068
          %v1070 = vlaneseq
          %v1071 = vshrl.u32 %v1070, 7
          %v1072 = vsub.s32 0, %v1071
          %v1073 = vrot.slane %v695, %v1072
          %v1074 = vlaneseq
          %v1075 = vshrl.u32 %v1074, 7
          %v1076 = vsub.s32 0, %v1075
          %v1077 = vrot.slane %v709, %v1076
          %v1078 = vlaneseq
          %v1079 = vshrl.u32 %v1078, 7
          %v1080 = vsub.s32 0, %v1079
          %v1081 = vrot.slane %v711, %v1080
          %v1082 = vlaneseq
          %v1083 = vshrl.u32 %v1082, 7
          %v1084 = vsub.s32 0, %v1083
          %v1085 = vrot.slane %v713, %v1084
          %v1086 = vlaneseq
          %v1087 = vshrl.u32 %v1086, 7
          %v1088 = vsub.s32 0, %v1087
          %v1089 = vrot.slane %v737, %v1088
          %v1090 = vlaneseq
          %v1091 = vshrl.u32 %v1090, 7
          %v1092 = vsub.s32 0, %v1091
          %v1093 = vrot.slane %v751, %v1092
          %v1094 = vlaneseq
          %v1095 = vshrl.u32 %v1094, 7
          %v1096 = vsub.s32 0, %v1095
          %v1097 = vrot.slane %v759, %v1096
          %v1098 = vlaneseq
          %v1099 = vshrl.u32 %v1098, 7
          %v1100 = vsub.s32 0, %v1099
          %v1101 = vrot.slane %v761, %v1100
          %v1102 = vlaneseq
          %v1103 = vshrl.u32 %v1102, 7
          %v1104 = vsub.s32 0, %v1103
          %v1105 = vrot.slane %v744, %v1104
          %v1106 = vlaneseq
          %v1107 = vshrl.u32 %v1106, 7
          %v1108 = vsub.s32 0, %v1107
          %v1109 = vrot.slane %v758, %v1108
          %v1110 = vlaneseq
          %v1111 = vshrl.u32 %v1110, 7
          %v1112 = vsub.s32 0, %v1111
          %v1113 = vrot.slane %v760, %v1112
          %v1114 = vlaneseq
          %v1115 = vshrl.u32 %v1114, 7
          %v1116 = vsub.s32 0, %v1115
          %v1117 = vrot.slane %v762, %v1116
          %v1118 = vlaneseq
          %v1119 = vshrl.u32 %v1118, 7
          %v1120 = vsub.s32 0, %v1119
          %v1121 = vrot.slane %v786, %v1120
          %v1122 = vlaneseq
          %v1123 = vshrl.u32 %v1122, 7
          %v1124 = vsub.s32 0, %v1123
          %v1125 = vrot.slane %v800, %v1124
          %v1126 = vlaneseq
          %v1127 = vshrl.u32 %v1126, 7
          %v1128 = vsub.s32 0, %v1127
          %v1129 = vrot.slane %v808, %v1128
          %v1130 = vlaneseq
          %v1131 = vshrl.u32 %v1130, 7
          %v1132 = vsub.s32 0, %v1131
          %v1133 = vrot.slane %v810, %v1132
          %v1134 = vlaneseq
          %v1135 = vshrl.u32 %v1134, 7
          %v1136 = vsub.s32 0, %v1135
          %v1137 = vrot.slane %v793, %v1136
          %v1138 = vlaneseq
          %v1139 = vshrl.u32 %v1138, 7
          %v1140 = vsub.s32 0, %v1139
          %v1141 = vrot.slane %v807, %v1140
          %v1142 = vlaneseq
          %v1143 = vshrl.u32 %v1142, 7
          %v1144 = vsub.s32 0, %v1143
          %v1145 = vrot.slane %v809, %v1144
          %v1146 = vlaneseq
          %v1147 = vshrl.u32 %v1146, 7
          %v1148 = vsub.s32 0, %v1147
          %v1149 = vrot.slane %v811, %v1148
          %v1150 = vlaneseq
          %v1151 = vshrl.u32 %v1150, 7
          %v1152 = vsub.s32 0, %v1151
          %v1153 = vrot.slane %v835, %v1152
          %v1154 = vlaneseq
          %v1155 = vshrl.u32 %v1154, 7
          %v1156 = vsub.s32 0, %v1155
          %v1157 = vrot.slane %v849, %v1156
          %v1158 = vlaneseq
          %v1159 = vshrl.u32 %v1158, 7
          %v1160 = vsub.s32 0, %v1159
          %v1161 = vrot.slane %v857, %v1160
          %v1162 = vlaneseq
          %v1163 = vshrl.u32 %v1162, 7
          %v1164 = vsub.s32 0, %v1163
          %v1165 = vrot.slane %v859, %v1164
          %v1166 = vlaneseq
          %v1167 = vshrl.u32 %v1166, 7
          %v1168 = vsub.s32 0, %v1167
          %v1169 = vrot.slane %v842, %v1168
          %v1170 = vlaneseq
          %v1171 = vshrl.u32 %v1170, 7
          %v1172 = vsub.s32 0, %v1171
          %v1173 = vrot.slane %v856, %v1172
          %v1174 = vlaneseq
          %v1175 = vshrl.u32 %v1174, 7
          %v1176 = vsub.s32 0, %v1175
          %v1177 = vrot.slane %v858, %v1176
          %v1178 = vlaneseq
          %v1179 = vshrl.u32 %v1178, 7
          %v1180 = vsub.s32 0, %v1179
          %v1181 = vrot.slane %v860, %v1180
          %v1262 = vadd.f32 %v865, %v861
          %v1263 = vadd.f32 %v869, %v861
          %v1264 = vadd.f32 %v873, %v861
          %v1265 = vadd.f32 %v877, %v861
          %v1266 = vadd.f32 %v881, %v861
          %v1267 = vadd.f32 %v885, %v861
          %v1268 = vadd.f32 %v889, %v861
          %v1269 = vadd.f32 %v893, %v861
          %v1270 = vadd.f32 %v897, %v861
          %v1271 = vadd.f32 %v901, %v861
          %v1272 = vadd.f32 %v905, %v861
          %v1273 = vadd.f32 %v909, %v861
          %v1274 = vadd.f32 %v913, %v861
          %v1275 = vadd.f32 %v917, %v861
          %v1276 = vadd.f32 %v921, %v861
          %v1277 = vadd.f32 %v925, %v861
          %v1278 = vadd.f32 %v929, %v861
          %v1279 = vadd.f32 %v933, %v861
          %v1280 = vadd.f32 %v937, %v861
          %v1281 = vadd.f32 %v941, %v861
          %v1282 = vadd.f32 %v945, %v861
          %v1283 = vadd.f32 %v949, %v861
          %v1284 = vadd.f32 %v953, %v861
          %v1285 = vadd.f32 %v957, %v861
          %v1286 = vadd.f32 %v961, %v861
          %v1287 = vadd.f32 %v965, %v861
          %v1288 = vadd.f32 %v969, %v861
          %v1289 = vadd.f32 %v973, %v861
          %v1290 = vadd.f32 %v977, %v861
          %v1291 = vadd.f32 %v981, %v861
          %v1292 = vadd.f32 %v985, %v861
          %v1293 = vadd.f32 %v989, %v861
          %v1294 = vadd.f32 %v993, %v861
          %v1295 = vadd.f32 %v997, %v861
          %v1296 = vadd.f32 %v1001, %v861
          %v1297 = vadd.f32 %v1005, %v861
          %v1298 = vadd.f32 %v1009, %v861
          %v1299 = vadd.f32 %v1013, %v861
          %v1300 = vadd.f32 %v1017, %v861
          %v1301 = vadd.f32 %v1021, %v861
          %v1302 = vadd.f32 %v1025, %v861
          %v1303 = vadd.f32 %v1029, %v861
          %v1304 = vadd.f32 %v1033, %v861
          %v1305 = vadd.f32 %v1037, %v861
          %v1306 = vadd.f32 %v1041, %v861
          %v1307 = vadd.f32 %v1045, %v861
          %v1308 = vadd.f32 %v1049, %v861
          %v1309 = vadd.f32 %v1053, %v861
          %v1310 = vadd.f32 %v1057, %v861
          %v1311 = vadd.f32 %v1061, %v861
          %v1312 = vadd.f32 %v1065, %v861
          %v1313 = vadd.f32 %v1069, %v861
          %v1314 = vadd.f32 %v1073, %v861
          %v1315 = vadd.f32 %v1077, %v861
          %v1316 = vadd.f32 %v1081, %v861
          %v1317 = vadd.f32 %v1085, %v861
          %v1318 = vadd.f32 %v1089, %v861
          %v1319 = vadd.f32 %v1093, %v861
          %v1320 = vadd.f32 %v1097, %v861
          %v1321 = vadd.f32 %v1101, %v861
          %v1322 = vadd.f32 %v1105, %v861
          %v1323 = vadd.f32 %v1109, %v861
          %v1324 = vadd.f32 %v1113, %v861
          %v1325 = vadd.f32 %v1117, %v861
          %v1326 = vadd.f32 %v1121, %v861
          %v1327 = vadd.f32 %v1125, %v861
          %v1328 = vadd.f32 %v1129, %v861
          %v1329 = vadd.f32 %v1133, %v861
          %v1330 = vadd.f32 %v1137, %v861
          %v1331 = vadd.f32 %v1141, %v861
          %v1332 = vadd.f32 %v1145, %v861
          %v1333 = vadd.f32 %v1149, %v861
          %v1334 = vadd.f32 %v1153, %v861
          %v1335 = vadd.f32 %v1157, %v861
          %v1336 = vadd.f32 %v1161, %v861
          %v1337 = vadd.f32 %v1165, %v861
          %v1338 = vadd.f32 %v1169, %v861
          %v1339 = vadd.f32 %v1173, %v861
          %v1340 = vadd.f32 %v1177, %v861
          %v1341 = vadd.f32 %v1181, %v861
          %v1342 = vpack.c.bf16 %v1263, %v1262
          %v1343 = vpack.c.bf16 %v1265, %v1264
          %v1344 = vpack.c.bf16 %v1267, %v1266
          %v1345 = vpack.c.bf16 %v1269, %v1268
          %v1346 = vpack.c.bf16 %v1271, %v1270
          %v1347 = vpack.c.bf16 %v1273, %v1272
          %v1348 = vpack.c.bf16 %v1275, %v1274
          %v1349 = vpack.c.bf16 %v1277, %v1276
          %v1350 = vpack.c.bf16 %v1279, %v1278
          %v1351 = vpack.c.bf16 %v1281, %v1280
          %v1352 = vpack.c.bf16 %v1283, %v1282
          %v1353 = vpack.c.bf16 %v1285, %v1284
          %v1354 = vpack.c.bf16 %v1287, %v1286
          %v1355 = vpack.c.bf16 %v1289, %v1288
          %v1356 = vpack.c.bf16 %v1291, %v1290
          %v1357 = vpack.c.bf16 %v1293, %v1292
          %v1358 = vpack.c.bf16 %v1295, %v1294
          %v1359 = vpack.c.bf16 %v1297, %v1296
          %v1360 = vpack.c.bf16 %v1299, %v1298
          %v1361 = vpack.c.bf16 %v1301, %v1300
          %v1362 = vpack.c.bf16 %v1303, %v1302
          %v1363 = vpack.c.bf16 %v1305, %v1304
          %v1364 = vpack.c.bf16 %v1307, %v1306
          %v1365 = vpack.c.bf16 %v1309, %v1308
          %v1366 = vpack.c.bf16 %v1311, %v1310
          %v1367 = vpack.c.bf16 %v1313, %v1312
          %v1368 = vpack.c.bf16 %v1315, %v1314
          %v1369 = vpack.c.bf16 %v1317, %v1316
          %v1370 = vpack.c.bf16 %v1319, %v1318
          %v1371 = vpack.c.bf16 %v1321, %v1320
          %v1372 = vpack.c.bf16 %v1323, %v1322
          %v1373 = vpack.c.bf16 %v1325, %v1324
          %v1374 = vpack.c.bf16 %v1327, %v1326
          %v1375 = vpack.c.bf16 %v1329, %v1328
          %v1376 = vpack.c.bf16 %v1331, %v1330
          %v1377 = vpack.c.bf16 %v1333, %v1332
          %v1378 = vpack.c.bf16 %v1335, %v1334
          %v1379 = vpack.c.bf16 %v1337, %v1336
          %v1380 = vpack.c.bf16 %v1339, %v1338
          %v1381 = vpack.c.bf16 %v1341, %v1340
          %v1382 = vmax.bf16 %v1342, 0
          %v1383 = vmax.bf16 %v1343, 0
          %v1384 = vmax.bf16 %v1344, 0
          %v1385 = vmax.bf16 %v1345, 0
          %v1386 = vmax.bf16 %v1346, 0
          %v1387 = vmax.bf16 %v1347, 0
          %v1388 = vmax.bf16 %v1348, 0
          %v1389 = vmax.bf16 %v1349, 0
          %v1390 = vmax.bf16 %v1350, 0
          %v1391 = vmax.bf16 %v1351, 0
          %v1392 = vmax.bf16 %v1352, 0
          %v1393 = vmax.bf16 %v1353, 0
          %v1394 = vmax.bf16 %v1354, 0
          %v1395 = vmax.bf16 %v1355, 0
          %v1396 = vmax.bf16 %v1356, 0
          %v1397 = vmax.bf16 %v1357, 0
          %v1398 = vmax.bf16 %v1358, 0
          %v1399 = vmax.bf16 %v1359, 0
          %v1400 = vmax.bf16 %v1360, 0
          %v1401 = vmax.bf16 %v1361, 0
          %v1402 = vmax.bf16 %v1362, 0
          %v1403 = vmax.bf16 %v1363, 0
          %v1404 = vmax.bf16 %v1364, 0
          %v1405 = vmax.bf16 %v1365, 0
          %v1406 = vmax.bf16 %v1366, 0
          %v1407 = vmax.bf16 %v1367, 0
          %v1408 = vmax.bf16 %v1368, 0
          %v1409 = vmax.bf16 %v1369, 0
          %v1410 = vmax.bf16 %v1370, 0
          %v1411 = vmax.bf16 %v1371, 0
          %v1412 = vmax.bf16 %v1372, 0
          %v1413 = vmax.bf16 %v1373, 0
          %v1414 = vmax.bf16 %v1374, 0
          %v1415 = vmax.bf16 %v1375, 0
          %v1416 = vmax.bf16 %v1376, 0
          %v1417 = vmax.bf16 %v1377, 0
          %v1418 = vmax.bf16 %v1378, 0
          %v1419 = vmax.bf16 %v1379, 0
          %v1420 = vmax.bf16 %v1380, 0
          %v1421 = vmax.bf16 %v1381, 0
          %1422 = vst [vmem:[#allocation2] sm:$0xff] %v1382
          %1423 = vst [vmem:[#allocation2 + $0x8] sm:$0xff] %v1383
          %1424 = vst [vmem:[#allocation2 + $0x10] sm:$0xff] %v1384
          %1425 = vst [vmem:[#allocation2 + $0x18] sm:$0xff] %v1385
          %1426 = vst [vmem:[#allocation2 + $0x20] sm:$0xff] %v1386
          %1427 = vst [vmem:[#allocation2 + $0x28] sm:$0xff] %v1387
          %1428 = vst [vmem:[#allocation2 + $0x30] sm:$0xff] %v1388
          %1429 = vst [vmem:[#allocation2 + $0x38] sm:$0xff] %v1389
          %1430 = vst [vmem:[#allocation2 + $0x40] sm:$0xff] %v1390
          %1431 = vst [vmem:[#allocation2 + $0x48] sm:$0xff] %v1391
          %1432 = vst [vmem:[#allocation2 + $0x50] sm:$0xff] %v1392
          %1433 = vst [vmem:[#allocation2 + $0x58] sm:$0xff] %v1393
          %1434 = vst [vmem:[#allocation2 + $0x60] sm:$0xff] %v1394
          %1435 = vst [vmem:[#allocation2 + $0x68] sm:$0xff] %v1395
          %1436 = vst [vmem:[#allocation2 + $0x70] sm:$0xff] %v1396
          %1437 = vst [vmem:[#allocation2 + $0x78] sm:$0xff] %v1397
          %1438 = vst [vmem:[#allocation2 + $0x80] sm:$0xff] %v1398
          %1439 = vst [vmem:[#allocation2 + $0x88] sm:$0xff] %v1399
          %1440 = vst [vmem:[#allocation2 + $0x90] sm:$0xff] %v1400
          %1441 = vst [vmem:[#allocation2 + $0x98] sm:$0xff] %v1401
          %1442 = vst [vmem:[#allocation2 + $0xa0] sm:$0xff] %v1402
          %1443 = vst [vmem:[#allocation2 + $0xa8] sm:$0xff] %v1403
          %1444 = vst [vmem:[#allocation2 + $0xb0] sm:$0xff] %v1404
          %1445 = vst [vmem:[#allocation2 + $0xb8] sm:$0xff] %v1405
          %1446 = vst [vmem:[#allocation2 + $0xc0] sm:$0xff] %v1406
          %1447 = vst [vmem:[#allocation2 + $0xc8] sm:$0xff] %v1407
          %1448 = vst [vmem:[#allocation2 + $0xd0] sm:$0xff] %v1408
          %1449 = vst [vmem:[#allocation2 + $0xd8] sm:$0xff] %v1409
          %1450 = vst [vmem:[#allocation2 + $0xe0] sm:$0xff] %v1410
          %1451 = vst [vmem:[#allocation2 + $0xe8] sm:$0xff] %v1411
          %1452 = vst [vmem:[#allocation2 + $0xf0] sm:$0xff] %v1412
          %1453 = vst [vmem:[#allocation2 + $0xf8] sm:$0xff] %v1413
          %1454 = vst [vmem:[#allocation2 + $0x100] sm:$0xff] %v1414
          %1455 = vst [vmem:[#allocation2 + $0x108] sm:$0xff] %v1415
          %1456 = vst [vmem:[#allocation2 + $0x110] sm:$0xff] %v1416
          %1457 = vst [vmem:[#allocation2 + $0x118] sm:$0xff] %v1417
          %1458 = vst [vmem:[#allocation2 + $0x120] sm:$0xff] %v1418
          %1459 = vst [vmem:[#allocation2 + $0x128] sm:$0xff] %v1419
          %1460 = vst [vmem:[#allocation2 + $0x130] sm:$0xff] %v1420
          %1461 = vst [vmem:[#allocation2 + $0x138] sm:$0xff] %v1421
        $region52: #{tpu_custom_call.1} parent=35 // pred_fallthru
          _
        %v1462 = vld [vmem:[#allocation2] sm:$0xff]
        %v1463 = vld [vmem:[#allocation2 + $0x8] sm:$0xff]
        %v1464 = vld [vmem:[#allocation2 + $0x10] sm:$0xff]
        %v1465 = vld [vmem:[#allocation2 + $0x18] sm:$0xff]
        %v1466 = vld [vmem:[#allocation2 + $0x20] sm:$0xff]
        %v1467 = vld [vmem:[#allocation2 + $0x28] sm:$0xff]
        %v1468 = vld [vmem:[#allocation2 + $0x30] sm:$0xff]
        %v1469 = vld [vmem:[#allocation2 + $0x38] sm:$0xff]
        %v1470 = vld [vmem:[#allocation2 + $0x40] sm:$0xff]
        %v1471 = vld [vmem:[#allocation2 + $0x48] sm:$0xff]
        %v1472 = vld [vmem:[#allocation2 + $0x50] sm:$0xff]
        %v1473 = vld [vmem:[#allocation2 + $0x58] sm:$0xff]
        %v1474 = vld [vmem:[#allocation2 + $0x60] sm:$0xff]
        %v1475 = vld [vmem:[#allocation2 + $0x68] sm:$0xff]
        %v1476 = vld [vmem:[#allocation2 + $0x70] sm:$0xff]
        %v1477 = vld [vmem:[#allocation2 + $0x78] sm:$0xff]
        %v1478 = vld [vmem:[#allocation2 + $0x80] sm:$0xff]
        %v1479 = vld [vmem:[#allocation2 + $0x88] sm:$0xff]
        %v1480 = vld [vmem:[#allocation2 + $0x90] sm:$0xff]
        %v1481 = vld [vmem:[#allocation2 + $0x98] sm:$0xff]
        %v1482 = vld [vmem:[#allocation2 + $0xa0] sm:$0xff]
        %v1483 = vld [vmem:[#allocation2 + $0xa8] sm:$0xff]
        %v1484 = vld [vmem:[#allocation2 + $0xb0] sm:$0xff]
        %v1485 = vld [vmem:[#allocation2 + $0xb8] sm:$0xff]
        %v1486 = vld [vmem:[#allocation2 + $0xc0] sm:$0xff]
        %v1487 = vld [vmem:[#allocation2 + $0xc8] sm:$0xff]
        %v1488 = vld [vmem:[#allocation2 + $0xd0] sm:$0xff]
        %v1489 = vld [vmem:[#allocation2 + $0xd8] sm:$0xff]
        %v1490 = vld [vmem:[#allocation2 + $0xe0] sm:$0xff]
        %v1491 = vld [vmem:[#allocation2 + $0xe8] sm:$0xff]
        %v1492 = vld [vmem:[#allocation2 + $0xf0] sm:$0xff]
        %v1493 = vld [vmem:[#allocation2 + $0xf8] sm:$0xff]
        %v1494 = vld [vmem:[#allocation2 + $0x100] sm:$0xff]
        %v1495 = vld [vmem:[#allocation2 + $0x108] sm:$0xff]
        %v1496 = vld [vmem:[#allocation2 + $0x110] sm:$0xff]
        %v1497 = vld [vmem:[#allocation2 + $0x118] sm:$0xff]
        %v1498 = vld [vmem:[#allocation2 + $0x120] sm:$0xff]
        %v1499 = vld [vmem:[#allocation2 + $0x128] sm:$0xff]
        %v1500 = vld [vmem:[#allocation2 + $0x130] sm:$0xff]
        %v1501 = vld [vmem:[#allocation2 + $0x138] sm:$0xff]
        %v1502 = vld [vmem:[%s327] sm:$0xff]
        %v1503 = vld [vmem:[%s327 + $0x8] sm:$0xf]
        %v1504 = vld [vmem:[%s327 + $0xc] sm:$0xff]
        %v1505 = vld [vmem:[%s327 + $0x14] sm:$0xf]
        %v1506 = vld [vmem:[%s327 + $0x18] sm:$0xff]
        %v1507 = vld [vmem:[%s327 + $0x20] sm:$0xf]
        %v1508 = vld [vmem:[%s327 + $0x24] sm:$0xff]
        %v1509 = vld [vmem:[%s327 + $0x2c] sm:$0xf]
        %v1510 = vld [vmem:[%s327 + $0x30] sm:$0xff]
        %v1511 = vld [vmem:[%s327 + $0x38] sm:$0xf]
        %v1512 = vld [vmem:[%s327 + $0x3c] sm:$0xff]
        %v1513 = vld [vmem:[%s327 + $0x44] sm:$0xf]
        %v1514 = vld [vmem:[%s327 + $0x48] sm:$0xff]
        %v1515 = vld [vmem:[%s327 + $0x50] sm:$0xf]
        %v1516 = vld [vmem:[%s327 + $0x54] sm:$0xff]
        %v1517 = vld [vmem:[%s327 + $0x5c] sm:$0xf]
        %v1518 = vld [vmem:[%s327 + $0x60] sm:$0xff]
        %v1519 = vld [vmem:[%s327 + $0x68] sm:$0xf]
        %v1520 = vld [vmem:[%s327 + $0x6c] sm:$0xff]
        %v1521 = vld [vmem:[%s327 + $0x74] sm:$0xf]
        %v1522 = vld [vmem:[%s327 + $0x78] sm:$0xff]
        %v1523 = vld [vmem:[%s327 + $0x80] sm:$0xf]
        %v1524 = vld [vmem:[%s327 + $0x84] sm:$0xff]
        %v1525 = vld [vmem:[%s327 + $0x8c] sm:$0xf]
        %v1526 = vld [vmem:[%s327 + $0x90] sm:$0xff]
        %v1527 = vld [vmem:[%s327 + $0x98] sm:$0xf]
        %v1528 = vld [vmem:[%s327 + $0x9c] sm:$0xff]
        %v1529 = vld [vmem:[%s327 + $0xa4] sm:$0xf]
        %v1530 = vld [vmem:[%s327 + $0xa8] sm:$0xff]
        %v1531 = vld [vmem:[%s327 + $0xb0] sm:$0xf]
        %v1532 = vld [vmem:[%s327 + $0xb4] sm:$0xff]
        %v1533 = vld [vmem:[%s327 + $0xbc] sm:$0xf]
        %v1534 = vld [vmem:[#allocation7] sm:$0x7]
        %v1536 = vlaneseq
        %v1537 = vshrl.u32 %v1536, 7
        %v1538 = vsub.s32 0, %v1537
        %v1539 = vrot.slane %v1534, %v1538
        %v1540 = vlaneseq
        %v1541 = vshrl.u32 %v1540, 7
        %v1542 = vsub.s32 1, %v1541
        %v1543 = vrot.slane %v1534, %v1542
        %v1544 = vlaneseq
        %v1545 = vshrl.u32 %v1544, 7
        %v1546 = vsub.s32 2, %v1545
        %v1547 = vrot.slane %v1534, %v1546
        %v1583 = vunpack.c.l.b16 %v1502
        %v1584 = vunpack.c.h.b16 %v1502
        %v1585 = vunpack.c.l.b16 %v1503
        %v1586 = vunpack.c.l.b16 %v1504
        %v1587 = vunpack.c.h.b16 %v1504
        %v1588 = vunpack.c.l.b16 %v1505
        %v1589 = vunpack.c.l.b16 %v1506
        %v1590 = vunpack.c.h.b16 %v1506
        %v1591 = vunpack.c.l.b16 %v1507
        %v1592 = vunpack.c.l.b16 %v1508
        %v1593 = vunpack.c.h.b16 %v1508
        %v1594 = vunpack.c.l.b16 %v1509
        %v1595 = vunpack.c.l.b16 %v1510
        %v1596 = vunpack.c.h.b16 %v1510
        %v1597 = vunpack.c.l.b16 %v1511
        %v1598 = vunpack.c.l.b16 %v1512
        %v1599 = vunpack.c.h.b16 %v1512
        %v1600 = vunpack.c.l.b16 %v1513
        %v1601 = vunpack.c.l.b16 %v1514
        %v1602 = vunpack.c.h.b16 %v1514
        %v1603 = vunpack.c.l.b16 %v1515
        %v1604 = vunpack.c.l.b16 %v1516
        %v1605 = vunpack.c.h.b16 %v1516
        %v1606 = vunpack.c.l.b16 %v1517
        %v1607 = vunpack.c.l.b16 %v1518
        %v1608 = vunpack.c.h.b16 %v1518
        %v1609 = vunpack.c.l.b16 %v1519
        %v1610 = vunpack.c.l.b16 %v1520
        %v1611 = vunpack.c.h.b16 %v1520
        %v1612 = vunpack.c.l.b16 %v1521
        %v1613 = vunpack.c.l.b16 %v1522
        %v1614 = vunpack.c.h.b16 %v1522
        %v1615 = vunpack.c.l.b16 %v1523
        %v1616 = vunpack.c.l.b16 %v1524
        %v1617 = vunpack.c.h.b16 %v1524
        %v1618 = vunpack.c.l.b16 %v1525
        %v1619 = vunpack.c.l.b16 %v1526
        %v1620 = vunpack.c.h.b16 %v1526
        %v1621 = vunpack.c.l.b16 %v1527
        %v1622 = vunpack.c.l.b16 %v1528
        %v1623 = vunpack.c.h.b16 %v1528
        %v1624 = vunpack.c.l.b16 %v1529
        %v1625 = vunpack.c.l.b16 %v1530
        %v1626 = vunpack.c.h.b16 %v1530
        %v1627 = vunpack.c.l.b16 %v1531
        %v1628 = vunpack.c.l.b16 %v1532
        %v1629 = vunpack.c.h.b16 %v1532
        %v1630 = vunpack.c.l.b16 %v1533
        %v1631 = vpack.c.b16 %v1586, %v1583
        %v1632 = vpack.c.b16 %v1587, %v1584
        %v1633 = vpack.c.b16 %v1588, %v1585
        %v1634 = vpack.c.b16 %v1592, %v1589
        %v1635 = vpack.c.b16 %v1593, %v1590
        %v1636 = vpack.c.b16 %v1594, %v1591
        %v1637 = vpack.c.b16 %v1598, %v1595
        %v1638 = vpack.c.b16 %v1599, %v1596
        %v1639 = vpack.c.b16 %v1600, %v1597
        %v1640 = vpack.c.b16 %v1604, %v1601
        %v1641 = vpack.c.b16 %v1605, %v1602
        %v1642 = vpack.c.b16 %v1606, %v1603
        %v1643 = vpack.c.b16 %v1610, %v1607
        %v1644 = vpack.c.b16 %v1611, %v1608
        %v1645 = vpack.c.b16 %v1612, %v1609
        %v1646 = vpack.c.b16 %v1616, %v1613
        %v1647 = vpack.c.b16 %v1617, %v1614
        %v1648 = vpack.c.b16 %v1618, %v1615
        %v1649 = vpack.c.b16 %v1622, %v1619
        %v1650 = vpack.c.b16 %v1623, %v1620
        %v1651 = vpack.c.b16 %v1624, %v1621
        %v1652 = vpack.c.b16 %v1628, %v1625
        %v1653 = vpack.c.b16 %v1629, %v1626
        %v1654 = vpack.c.b16 %v1630, %v1627
        %1679 = vmatprep.subr.bf16.mxu0 %v1632
        %1680 = vmatpush1.bf16.msra.mxu0 %v1631
        %1681 = vmatprep.subr.bf16.mxu0 %v1635
        %1682 = vmatpush1.bf16.msra.mxu0 %v1634
        %1683 = vmatprep.subr.bf16.mxu0 %v1638
        %1684 = vmatpush1.bf16.msra.mxu0 %v1637
        %1685 = vmatprep.subr.bf16.mxu0 %v1641
        %1686 = vmatpush1.bf16.msra.mxu0 %v1640
        %1687 = vmatprep.subr.bf16.mxu0 %v1644
        %1688 = vmatpush1.bf16.msra.mxu0 %v1643
        %1689 = vmatprep.subr.bf16.mxu0 %v1647
        %1690 = vmatpush1.bf16.msra.mxu0 %v1646
        %1691 = vmatprep.subr.bf16.mxu0 %v1650
        %1692 = vmatpush1.bf16.msra.mxu0 %v1649
        %1693 = vmatprep.subr.bf16.mxu0 %v1653
        %1694 = vmatpush1.bf16.msra.mxu0 %v1652
        %1695 = vmatprep.subr.bf16.mxu0 0
        %1696 = vmatpush1.bf16.msra.mxu0 0
        %1697 = vmatprep.subr.bf16.mxu0 0
        %1698 = vmatpush1.bf16.msra.mxu0 0
        %1699 = vmatprep.subr.bf16.mxu0 0
        %1700 = vmatpush1.bf16.msra.mxu0 0
        %1701 = vmatprep.subr.bf16.mxu0 0
        %1702 = vmatpush1.bf16.msra.mxu0 0
        %1703 = vmatprep.subr.bf16.mxu0 0
        %1704 = vmatpush1.bf16.msra.mxu0 0
        %1705 = vmatprep.subr.bf16.mxu0 0
        %1706 = vmatpush1.bf16.msra.mxu0 0
        %1707 = vmatprep.subr.bf16.mxu0 0
        %1708 = vmatpush1.bf16.msra.mxu0 0
        %1709 = vmatprep.subr.bf16.mxu0 0
        %1710 = vmatpush1.bf16.msra.mxu0 0
        %1711 = vmatprep.mubr.bf16.mxu0 0
        %1712 = vmatmul.mubr.bf16.gmra.mrb[0].mxu0 %v1462
        %v1713 = vpop.f32.mrb[0].mxu0
        %v1714 = vadd.f32 %v1539, %v1713
        %v1715 = vpop.f32.mrb[0].mxu0
        %v1716 = vadd.f32 %v1543, %v1715
        %v1717 = vpop.f32.mrb[0].mxu0
        %v1718 = vadd.f32 %v1539, %v1717
        %v1719 = vpop.f32.mrb[0].mxu0
        %v1720 = vadd.f32 %v1543, %v1719
        %1721 = vmatprep.mubr.bf16.mxu0 0
        %1722 = vmatmul.mubr.bf16.gmra.mrb[0].mxu0 %v1463
        %v1723 = vpop.f32.mrb[0].mxu0
        %v1724 = vadd.f32 %v1539, %v1723
        %v1725 = vpop.f32.mrb[0].mxu0
        %v1726 = vadd.f32 %v1543, %v1725
        %v1727 = vpop.f32.mrb[0].mxu0
        %v1728 = vadd.f32 %v1539, %v1727
        %v1729 = vpop.f32.mrb[0].mxu0
        %v1730 = vadd.f32 %v1543, %v1729
        %1731 = vmatprep.mubr.bf16.mxu0 0
        %1732 = vmatmul.mubr.bf16.gmra.mrb[0].mxu0 %v1464
        %v1733 = vpop.f32.mrb[0].mxu0
        %v1734 = vadd.f32 %v1539, %v1733
        %v1735 = vpop.f32.mrb[0].mxu0
        %v1736 = vadd.f32 %v1543, %v1735
        %v1737 = vpop.f32.mrb[0].mxu0
        %v1738 = vadd.f32 %v1539, %v1737
        %v1739 = vpop.f32.mrb[0].mxu0
        %v1740 = vadd.f32 %v1543, %v1739
        %1741 = vmatprep.mubr.bf16.mxu0 0
        %1742 = vmatmul.mubr.bf16.gmra.mrb[0].mxu0 %v1465
        %v1743 = vpop.f32.mrb[0].mxu0
        %v1744 = vadd.f32 %v1539, %v1743
        %v1745 = vpop.f32.mrb[0].mxu0
        %v1746 = vadd.f32 %v1543, %v1745
        %v1747 = vpop.f32.mrb[0].mxu0
        %v1748 = vadd.f32 %v1539, %v1747
        %v1749 = vpop.f32.mrb[0].mxu0
        %v1750 = vadd.f32 %v1543, %v1749
        %1751 = vmatprep.mubr.bf16.mxu0 0
        %1752 = vmatmul.mubr.bf16.gmra.mrb[0].mxu0 %v1466
        %v1753 = vpop.f32.mrb[0].mxu0
        %v1754 = vadd.f32 %v1539, %v1753
        %v1755 = vpop.f32.mrb[0].mxu0
        %v1756 = vadd.f32 %v1543, %v1755
        %v1757 = vpop.f32.mrb[0].mxu0
        %v1758 = vadd.f32 %v1539, %v1757
        %v1759 = vpop.f32.mrb[0].mxu0
        %v1760 = vadd.f32 %v1543, %v1759
        %1761 = vmatprep.mubr.bf16.mxu0 0
        %1762 = vmatmul.mubr.bf16.gmra.mrb[0].mxu0 %v1467
        %v1763 = vpop.f32.mrb[0].mxu0
        %v1764 = vadd.f32 %v1539, %v1763
        %v1765 = vpop.f32.mrb[0].mxu0
        %v1766 = vadd.f32 %v1543, %v1765
        %v1767 = vpop.f32.mrb[0].mxu0
        %v1768 = vadd.f32 %v1539, %v1767
        %v1769 = vpop.f32.mrb[0].mxu0
        %v1770 = vadd.f32 %v1543, %v1769
        %1771 = vmatprep.mubr.bf16.mxu0 0
        %1772 = vmatmul.mubr.bf16.gmra.mrb[0].mxu0 %v1468
        %v1773 = vpop.f32.mrb[0].mxu0
        %v1774 = vadd.f32 %v1539, %v1773
        %v1775 = vpop.f32.mrb[0].mxu0
        %v1776 = vadd.f32 %v1543, %v1775
        %v1777 = vpop.f32.mrb[0].mxu0
        %v1778 = vadd.f32 %v1539, %v1777
        %v1779 = vpop.f32.mrb[0].mxu0
        %v1780 = vadd.f32 %v1543, %v1779
        %1781 = vmatprep.mubr.bf16.mxu0 0
        %1782 = vmatmul.mubr.bf16.gmra.mrb[0].mxu0 %v1469
        %v1783 = vpop.f32.mrb[0].mxu0
        %v1784 = vadd.f32 %v1539, %v1783
        %v1785 = vpop.f32.mrb[0].mxu0
        %v1786 = vadd.f32 %v1543, %v1785
        %v1787 = vpop.f32.mrb[0].mxu0
        %v1788 = vadd.f32 %v1539, %v1787
        %v1789 = vpop.f32.mrb[0].mxu0
        %v1790 = vadd.f32 %v1543, %v1789
        %1791 = vmatprep.mubr.bf16.mxu0 0
        %1792 = vmatmul.mubr.bf16.gmra.mrb[0].mxu0 %v1470
        %v1793 = vpop.f32.mrb[0].mxu0
        %v1794 = vadd.f32 %v1539, %v1793
        %v1795 = vpop.f32.mrb[0].mxu0
        %v1796 = vadd.f32 %v1543, %v1795
        %v1797 = vpop.f32.mrb[0].mxu0
        %v1798 = vadd.f32 %v1539, %v1797
        %v1799 = vpop.f32.mrb[0].mxu0
        %v1800 = vadd.f32 %v1543, %v1799
        %1801 = vmatprep.mubr.bf16.mxu0 0
        %1802 = vmatmul.mubr.bf16.gmra.mrb[0].mxu0 %v1471
        %v1803 = vpop.f32.mrb[0].mxu0
        %v1804 = vadd.f32 %v1539, %v1803
        %v1805 = vpop.f32.mrb[0].mxu0
        %v1806 = vadd.f32 %v1543, %v1805
        %v1807 = vpop.f32.mrb[0].mxu0
        %v1808 = vadd.f32 %v1539, %v1807
        %v1809 = vpop.f32.mrb[0].mxu0
        %v1810 = vadd.f32 %v1543, %v1809
        %1811 = vmatprep.mubr.bf16.mxu0 0
        %1812 = vmatmul.mubr.bf16.gmra.mrb[0].mxu0 %v1472
        %v1813 = vpop.f32.mrb[0].mxu0
        %v1814 = vadd.f32 %v1539, %v1813
        %v1815 = vpop.f32.mrb[0].mxu0
        %v1816 = vadd.f32 %v1543, %v1815
        %v1817 = vpop.f32.mrb[0].mxu0
        %v1818 = vadd.f32 %v1539, %v1817
        %v1819 = vpop.f32.mrb[0].mxu0
        %v1820 = vadd.f32 %v1543, %v1819
        %1821 = vmatprep.mubr.bf16.mxu0 0
        %1822 = vmatmul.mubr.bf16.gmra.mrb[0].mxu0 %v1473
        %v1823 = vpop.f32.mrb[0].mxu0
        %v1824 = vadd.f32 %v1539, %v1823
        %v1825 = vpop.f32.mrb[0].mxu0
        %v1826 = vadd.f32 %v1543, %v1825
        %v1827 = vpop.f32.mrb[0].mxu0
        %v1828 = vadd.f32 %v1539, %v1827
        %v1829 = vpop.f32.mrb[0].mxu0
        %v1830 = vadd.f32 %v1543, %v1829
        %1831 = vmatprep.mubr.bf16.mxu0 0
        %1832 = vmatmul.mubr.bf16.gmra.mrb[0].mxu0 %v1474
        %v1833 = vpop.f32.mrb[0].mxu0
        %v1834 = vadd.f32 %v1539, %v1833
        %v1835 = vpop.f32.mrb[0].mxu0
        %v1836 = vadd.f32 %v1543, %v1835
        %v1837 = vpop.f32.mrb[0].mxu0
        %v1838 = vadd.f32 %v1539, %v1837
        %v1839 = vpop.f32.mrb[0].mxu0
        %v1840 = vadd.f32 %v1543, %v1839
        %1841 = vmatprep.mubr.bf16.mxu0 0
        %1842 = vmatmul.mubr.bf16.gmra.mrb[0].mxu0 %v1475
        %v1843 = vpop.f32.mrb[0].mxu0
        %v1844 = vadd.f32 %v1539, %v1843
        %v1845 = vpop.f32.mrb[0].mxu0
        %v1846 = vadd.f32 %v1543, %v1845
        %v1847 = vpop.f32.mrb[0].mxu0
        %v1848 = vadd.f32 %v1539, %v1847
        %v1849 = vpop.f32.mrb[0].mxu0
        %v1850 = vadd.f32 %v1543, %v1849
        %1851 = vmatprep.mubr.bf16.mxu0 0
        %1852 = vmatmul.mubr.bf16.gmra.mrb[0].mxu0 %v1476
        %v1853 = vpop.f32.mrb[0].mxu0
        %v1854 = vadd.f32 %v1539, %v1853
        %v1855 = vpop.f32.mrb[0].mxu0
        %v1856 = vadd.f32 %v1543, %v1855
        %v1857 = vpop.f32.mrb[0].mxu0
        %v1858 = vadd.f32 %v1539, %v1857
        %v1859 = vpop.f32.mrb[0].mxu0
        %v1860 = vadd.f32 %v1543, %v1859
        %1861 = vmatprep.mubr.bf16.mxu0 0
        %1862 = vmatmul.mubr.bf16.gmra.mrb[0].mxu0 %v1477
        %v1863 = vpop.f32.mrb[0].mxu0
        %v1864 = vadd.f32 %v1539, %v1863
        %v1865 = vpop.f32.mrb[0].mxu0
        %v1866 = vadd.f32 %v1543, %v1865
        %v1867 = vpop.f32.mrb[0].mxu0
        %v1868 = vadd.f32 %v1539, %v1867
        %v1869 = vpop.f32.mrb[0].mxu0
        %v1870 = vadd.f32 %v1543, %v1869
        %1871 = vmatprep.mubr.bf16.mxu0 0
        %1872 = vmatmul.mubr.bf16.gmra.mrb[0].mxu0 %v1478
        %v1873 = vpop.f32.mrb[0].mxu0
        %v1874 = vadd.f32 %v1539, %v1873
        %v1875 = vpop.f32.mrb[0].mxu0
        %v1876 = vadd.f32 %v1543, %v1875
        %v1877 = vpop.f32.mrb[0].mxu0
        %v1878 = vadd.f32 %v1539, %v1877
        %v1879 = vpop.f32.mrb[0].mxu0
        %v1880 = vadd.f32 %v1543, %v1879
        %1881 = vmatprep.mubr.bf16.mxu0 0
        %1882 = vmatmul.mubr.bf16.gmra.mrb[0].mxu0 %v1479
        %v1883 = vpop.f32.mrb[0].mxu0
        %v1884 = vadd.f32 %v1539, %v1883
        %v1885 = vpop.f32.mrb[0].mxu0
        %v1886 = vadd.f32 %v1543, %v1885
        %v1887 = vpop.f32.mrb[0].mxu0
        %v1888 = vadd.f32 %v1539, %v1887
        %v1889 = vpop.f32.mrb[0].mxu0
        %v1890 = vadd.f32 %v1543, %v1889
        %1891 = vmatprep.mubr.bf16.mxu0 0
        %1892 = vmatmul.mubr.bf16.gmra.mrb[0].mxu0 %v1480
        %v1893 = vpop.f32.mrb[0].mxu0
        %v1894 = vadd.f32 %v1539, %v1893
        %v1895 = vpop.f32.mrb[0].mxu0
        %v1896 = vadd.f32 %v1543, %v1895
        %v1897 = vpop.f32.mrb[0].mxu0
        %v1898 = vadd.f32 %v1539, %v1897
        %v1899 = vpop.f32.mrb[0].mxu0
        %v1900 = vadd.f32 %v1543, %v1899
        %1901 = vmatprep.mubr.bf16.mxu0 0
        %1902 = vmatmul.mubr.bf16.gmra.mrb[0].mxu0 %v1481
        %v1903 = vpop.f32.mrb[0].mxu0
        %v1904 = vadd.f32 %v1539, %v1903
        %v1905 = vpop.f32.mrb[0].mxu0
        %v1906 = vadd.f32 %v1543, %v1905
        %v1907 = vpop.f32.mrb[0].mxu0
        %v1908 = vadd.f32 %v1539, %v1907
        %v1909 = vpop.f32.mrb[0].mxu0
        %v1910 = vadd.f32 %v1543, %v1909
        %1911 = vmatprep.mubr.bf16.mxu0 0
        %1912 = vmatmul.mubr.bf16.gmra.mrb[0].mxu0 %v1482
        %v1913 = vpop.f32.mrb[0].mxu0
        %v1914 = vadd.f32 %v1539, %v1913
        %v1915 = vpop.f32.mrb[0].mxu0
        %v1916 = vadd.f32 %v1543, %v1915
        %v1917 = vpop.f32.mrb[0].mxu0
        %v1918 = vadd.f32 %v1539, %v1917
        %v1919 = vpop.f32.mrb[0].mxu0
        %v1920 = vadd.f32 %v1543, %v1919
        %1921 = vmatprep.mubr.bf16.mxu0 0
        %1922 = vmatmul.mubr.bf16.gmra.mrb[0].mxu0 %v1483
        %v1923 = vpop.f32.mrb[0].mxu0
        %v1924 = vadd.f32 %v1539, %v1923
        %v1925 = vpop.f32.mrb[0].mxu0
        %v1926 = vadd.f32 %v1543, %v1925
        %v1927 = vpop.f32.mrb[0].mxu0
        %v1928 = vadd.f32 %v1539, %v1927
        %v1929 = vpop.f32.mrb[0].mxu0
        %v1930 = vadd.f32 %v1543, %v1929
        %1931 = vmatprep.mubr.bf16.mxu0 0
        %1932 = vmatmul.mubr.bf16.gmra.mrb[0].mxu0 %v1484
        %v1933 = vpop.f32.mrb[0].mxu0
        %v1934 = vadd.f32 %v1539, %v1933
        %v1935 = vpop.f32.mrb[0].mxu0
        %v1936 = vadd.f32 %v1543, %v1935
        %v1937 = vpop.f32.mrb[0].mxu0
        %v1938 = vadd.f32 %v1539, %v1937
        %v1939 = vpop.f32.mrb[0].mxu0
        %v1940 = vadd.f32 %v1543, %v1939
        %1941 = vmatprep.mubr.bf16.mxu0 0
        %1942 = vmatmul.mubr.bf16.gmra.mrb[0].mxu0 %v1485
        %v1943 = vpop.f32.mrb[0].mxu0
        %v1944 = vadd.f32 %v1539, %v1943
        %v1945 = vpop.f32.mrb[0].mxu0
        %v1946 = vadd.f32 %v1543, %v1945
        %v1947 = vpop.f32.mrb[0].mxu0
        %v1948 = vadd.f32 %v1539, %v1947
        %v1949 = vpop.f32.mrb[0].mxu0
        %v1950 = vadd.f32 %v1543, %v1949
        %1951 = vmatprep.mubr.bf16.mxu0 0
        %1952 = vmatmul.mubr.bf16.gmra.mrb[0].mxu0 %v1486
        %v1953 = vpop.f32.mrb[0].mxu0
        %v1954 = vadd.f32 %v1539, %v1953
        %v1955 = vpop.f32.mrb[0].mxu0
        %v1956 = vadd.f32 %v1543, %v1955
        %v1957 = vpop.f32.mrb[0].mxu0
        %v1958 = vadd.f32 %v1539, %v1957
        %v1959 = vpop.f32.mrb[0].mxu0
        %v1960 = vadd.f32 %v1543, %v1959
        %1961 = vmatprep.mubr.bf16.mxu0 0
        %1962 = vmatmul.mubr.bf16.gmra.mrb[0].mxu0 %v1487
        %v1963 = vpop.f32.mrb[0].mxu0
        %v1964 = vadd.f32 %v1539, %v1963
        %v1965 = vpop.f32.mrb[0].mxu0
        %v1966 = vadd.f32 %v1543, %v1965
        %v1967 = vpop.f32.mrb[0].mxu0
        %v1968 = vadd.f32 %v1539, %v1967
        %v1969 = vpop.f32.mrb[0].mxu0
        %v1970 = vadd.f32 %v1543, %v1969
        %1971 = vmatprep.mubr.bf16.mxu0 0
        %1972 = vmatmul.mubr.bf16.gmra.mrb[0].mxu0 %v1488
        %v1973 = vpop.f32.mrb[0].mxu0
        %v1974 = vadd.f32 %v1539, %v1973
        %v1975 = vpop.f32.mrb[0].mxu0
        %v1976 = vadd.f32 %v1543, %v1975
        %v1977 = vpop.f32.mrb[0].mxu0
        %v1978 = vadd.f32 %v1539, %v1977
        %v1979 = vpop.f32.mrb[0].mxu0
        %v1980 = vadd.f32 %v1543, %v1979
        %1981 = vmatprep.mubr.bf16.mxu0 0
        %1982 = vmatmul.mubr.bf16.gmra.mrb[0].mxu0 %v1489
        %v1983 = vpop.f32.mrb[0].mxu0
        %v1984 = vadd.f32 %v1539, %v1983
        %v1985 = vpop.f32.mrb[0].mxu0
        %v1986 = vadd.f32 %v1543, %v1985
        %v1987 = vpop.f32.mrb[0].mxu0
        %v1988 = vadd.f32 %v1539, %v1987
        %v1989 = vpop.f32.mrb[0].mxu0
        %v1990 = vadd.f32 %v1543, %v1989
        %1991 = vmatprep.mubr.bf16.mxu0 0
        %1992 = vmatmul.mubr.bf16.gmra.mrb[0].mxu0 %v1490
        %v1993 = vpop.f32.mrb[0].mxu0
        %v1994 = vadd.f32 %v1539, %v1993
        %v1995 = vpop.f32.mrb[0].mxu0
        %v1996 = vadd.f32 %v1543, %v1995
        %v1997 = vpop.f32.mrb[0].mxu0
        %v1998 = vadd.f32 %v1539, %v1997
        %v1999 = vpop.f32.mrb[0].mxu0
        %v2000 = vadd.f32 %v1543, %v1999
        %2001 = vmatprep.mubr.bf16.mxu0 0
        %2002 = vmatmul.mubr.bf16.gmra.mrb[0].mxu0 %v1491
        %v2003 = vpop.f32.mrb[0].mxu0
        %v2004 = vadd.f32 %v1539, %v2003
        %v2005 = vpop.f32.mrb[0].mxu0
        %v2006 = vadd.f32 %v1543, %v2005
        %v2007 = vpop.f32.mrb[0].mxu0
        %v2008 = vadd.f32 %v1539, %v2007
        %v2009 = vpop.f32.mrb[0].mxu0
        %v2010 = vadd.f32 %v1543, %v2009
        %2011 = vmatprep.mubr.bf16.mxu0 0
        %2012 = vmatmul.mubr.bf16.gmra.mrb[0].mxu0 %v1492
        %v2013 = vpop.f32.mrb[0].mxu0
        %v2014 = vadd.f32 %v1539, %v2013
        %v2015 = vpop.f32.mrb[0].mxu0
        %v2016 = vadd.f32 %v1543, %v2015
        %v2017 = vpop.f32.mrb[0].mxu0
        %v2018 = vadd.f32 %v1539, %v2017
        %v2019 = vpop.f32.mrb[0].mxu0
        %v2020 = vadd.f32 %v1543, %v2019
        %2021 = vmatprep.mubr.bf16.mxu0 0
        %2022 = vmatmul.mubr.bf16.gmra.mrb[0].mxu0 %v1493
        %v2023 = vpop.f32.mrb[0].mxu0
        %v2024 = vadd.f32 %v1539, %v2023
        %v2025 = vpop.f32.mrb[0].mxu0
        %v2026 = vadd.f32 %v1543, %v2025
        %v2027 = vpop.f32.mrb[0].mxu0
        %v2028 = vadd.f32 %v1539, %v2027
        %v2029 = vpop.f32.mrb[0].mxu0
        %v2030 = vadd.f32 %v1543, %v2029
        %2031 = vmatprep.mubr.bf16.mxu0 0
        %2032 = vmatmul.mubr.bf16.gmra.mrb[0].mxu0 %v1494
        %v2033 = vpop.f32.mrb[0].mxu0
        %v2034 = vadd.f32 %v1539, %v2033
        %v2035 = vpop.f32.mrb[0].mxu0
        %v2036 = vadd.f32 %v1543, %v2035
        %v2037 = vpop.f32.mrb[0].mxu0
        %v2038 = vadd.f32 %v1539, %v2037
        %v2039 = vpop.f32.mrb[0].mxu0
        %v2040 = vadd.f32 %v1543, %v2039
        %2041 = vmatprep.mubr.bf16.mxu0 0
        %2042 = vmatmul.mubr.bf16.gmra.mrb[0].mxu0 %v1495
        %v2043 = vpop.f32.mrb[0].mxu0
        %v2044 = vadd.f32 %v1539, %v2043
        %v2045 = vpop.f32.mrb[0].mxu0
        %v2046 = vadd.f32 %v1543, %v2045
        %v2047 = vpop.f32.mrb[0].mxu0
        %v2048 = vadd.f32 %v1539, %v2047
        %v2049 = vpop.f32.mrb[0].mxu0
        %v2050 = vadd.f32 %v1543, %v2049
        %2051 = vmatprep.mubr.bf16.mxu0 0
        %2052 = vmatmul.mubr.bf16.gmra.mrb[0].mxu0 %v1496
        %v2053 = vpop.f32.mrb[0].mxu0
        %v2054 = vadd.f32 %v1539, %v2053
        %v2055 = vpop.f32.mrb[0].mxu0
        %v2056 = vadd.f32 %v1543, %v2055
        %v2057 = vpop.f32.mrb[0].mxu0
        %v2058 = vadd.f32 %v1539, %v2057
        %v2059 = vpop.f32.mrb[0].mxu0
        %v2060 = vadd.f32 %v1543, %v2059
        %2061 = vmatprep.mubr.bf16.mxu0 0
        %2062 = vmatmul.mubr.bf16.gmra.mrb[0].mxu0 %v1497
        %v2063 = vpop.f32.mrb[0].mxu0
        %v2064 = vadd.f32 %v1539, %v2063
        %v2065 = vpop.f32.mrb[0].mxu0
        %v2066 = vadd.f32 %v1543, %v2065
        %v2067 = vpop.f32.mrb[0].mxu0
        %v2068 = vadd.f32 %v1539, %v2067
        %v2069 = vpop.f32.mrb[0].mxu0
        %v2070 = vadd.f32 %v1543, %v2069
        %2071 = vmatprep.mubr.bf16.mxu0 0
        %2072 = vmatmul.mubr.bf16.gmra.mrb[0].mxu0 %v1498
        %v2073 = vpop.f32.mrb[0].mxu0
        %v2074 = vadd.f32 %v1539, %v2073
        %v2075 = vpop.f32.mrb[0].mxu0
        %v2076 = vadd.f32 %v1543, %v2075
        %v2077 = vpop.f32.mrb[0].mxu0
        %v2078 = vadd.f32 %v1539, %v2077
        %v2079 = vpop.f32.mrb[0].mxu0
        %v2080 = vadd.f32 %v1543, %v2079
        %2081 = vmatprep.mubr.bf16.mxu0 0
        %2082 = vmatmul.mubr.bf16.gmra.mrb[0].mxu0 %v1499
        %v2083 = vpop.f32.mrb[0].mxu0
        %v2084 = vadd.f32 %v1539, %v2083
        %v2085 = vpop.f32.mrb[0].mxu0
        %v2086 = vadd.f32 %v1543, %v2085
        %v2087 = vpop.f32.mrb[0].mxu0
        %v2088 = vadd.f32 %v1539, %v2087
        %v2089 = vpop.f32.mrb[0].mxu0
        %v2090 = vadd.f32 %v1543, %v2089
        %2091 = vmatprep.mubr.bf16.mxu0 0
        %2092 = vmatmul.mubr.bf16.gmra.mrb[0].mxu0 %v1500
        %v2093 = vpop.f32.mrb[0].mxu0
        %v2094 = vadd.f32 %v1539, %v2093
        %v2095 = vpop.f32.mrb[0].mxu0
        %v2096 = vadd.f32 %v1543, %v2095
        %v2097 = vpop.f32.mrb[0].mxu0
        %v2098 = vadd.f32 %v1539, %v2097
        %v2099 = vpop.f32.mrb[0].mxu0
        %v2100 = vadd.f32 %v1543, %v2099
        %2101 = vmatprep.mubr.bf16.mxu0 0
        %2102 = vmatmul.mubr.bf16.gmra.mrb[0].mxu0 %v1501
        %v2103 = vpop.f32.mrb[0].mxu0
        %v2104 = vadd.f32 %v1539, %v2103
        %v2105 = vpop.f32.mrb[0].mxu0
        %v2106 = vadd.f32 %v1543, %v2105
        %v2107 = vpop.f32.mrb[0].mxu0
        %v2108 = vadd.f32 %v1539, %v2107
        %v2109 = vpop.f32.mrb[0].mxu0
        %v2110 = vadd.f32 %v1543, %v2109
        %2111 = vdwg.mxu0
        %2112 = vmatprep.subr.bf16.mxu0 0
        %2113 = vmatpush1.bf16.msra.mxu0 %v1633
        %2114 = vmatprep.subr.bf16.mxu0 0
        %2115 = vmatpush1.bf16.msra.mxu0 %v1636
        %2116 = vmatprep.subr.bf16.mxu0 0
        %2117 = vmatpush1.bf16.msra.mxu0 %v1639
        %2118 = vmatprep.subr.bf16.mxu0 0
        %2119 = vmatpush1.bf16.msra.mxu0 %v1642
        %2120 = vmatprep.subr.bf16.mxu0 0
        %2121 = vmatpush1.bf16.msra.mxu0 %v1645
        %2122 = vmatprep.subr.bf16.mxu0 0
        %2123 = vmatpush1.bf16.msra.mxu0 %v1648
        %2124 = vmatprep.subr.bf16.mxu0 0
        %2125 = vmatpush1.bf16.msra.mxu0 %v1651
        %2126 = vmatprep.subr.bf16.mxu0 0
        %2127 = vmatpush1.bf16.msra.mxu0 %v1654
        %2128 = vmatprep.subr.bf16.mxu0 0
        %2129 = vmatpush1.bf16.msra.mxu0 0
        %2130 = vmatprep.subr.bf16.mxu0 0
        %2131 = vmatpush1.bf16.msra.mxu0 0
        %2132 = vmatprep.subr.bf16.mxu0 0
        %2133 = vmatpush1.bf16.msra.mxu0 0
        %2134 = vmatprep.subr.bf16.mxu0 0
        %2135 = vmatpush1.bf16.msra.mxu0 0
        %2136 = vmatprep.subr.bf16.mxu0 0
        %2137 = vmatpush1.bf16.msra.mxu0 0
        %2138 = vmatprep.subr.bf16.mxu0 0
        %2139 = vmatpush1.bf16.msra.mxu0 0
        %2140 = vmatprep.subr.bf16.mxu0 0
        %2141 = vmatpush1.bf16.msra.mxu0 0
        %2142 = vmatprep.subr.bf16.mxu0 0
        %2143 = vmatpush1.bf16.msra.mxu0 0
        %2144 = vmatprep.mubr.bf16.mxu0 0
        %2145 = vmatmul.mubr.bf16.gmra.mrb[0].mxu0 %v1462
        %v2146 = vpop.f32.mrb[0].mxu0
        %v2147 = vadd.f32 %v1547, %v2146
        %v2148 = vpop.f32.mrb[0].mxu0
        %v2149 = vpop.f32.mrb[0].mxu0
        %v2150 = vadd.f32 %v1547, %v2149
        %v2151 = vpop.f32.mrb[0].mxu0
        %2152 = vmatprep.mubr.bf16.mxu0 0
        %2153 = vmatmul.mubr.bf16.gmra.mrb[0].mxu0 %v1463
        %v2154 = vpop.f32.mrb[0].mxu0
        %v2155 = vadd.f32 %v1547, %v2154
        %v2156 = vpop.f32.mrb[0].mxu0
        %v2157 = vpop.f32.mrb[0].mxu0
        %v2158 = vadd.f32 %v1547, %v2157
        %v2159 = vpop.f32.mrb[0].mxu0
        %2160 = vmatprep.mubr.bf16.mxu0 0
        %2161 = vmatmul.mubr.bf16.gmra.mrb[0].mxu0 %v1464
        %v2162 = vpop.f32.mrb[0].mxu0
        %v2163 = vadd.f32 %v1547, %v2162
        %v2164 = vpop.f32.mrb[0].mxu0
        %v2165 = vpop.f32.mrb[0].mxu0
        %v2166 = vadd.f32 %v1547, %v2165
        %v2167 = vpop.f32.mrb[0].mxu0
        %2168 = vmatprep.mubr.bf16.mxu0 0
        %2169 = vmatmul.mubr.bf16.gmra.mrb[0].mxu0 %v1465
        %v2170 = vpop.f32.mrb[0].mxu0
        %v2171 = vadd.f32 %v1547, %v2170
        %v2172 = vpop.f32.mrb[0].mxu0
        %v2173 = vpop.f32.mrb[0].mxu0
        %v2174 = vadd.f32 %v1547, %v2173
        %v2175 = vpop.f32.mrb[0].mxu0
        %2176 = vmatprep.mubr.bf16.mxu0 0
        %2177 = vmatmul.mubr.bf16.gmra.mrb[0].mxu0 %v1466
        %v2178 = vpop.f32.mrb[0].mxu0
        %v2179 = vadd.f32 %v1547, %v2178
        %v2180 = vpop.f32.mrb[0].mxu0
        %v2181 = vpop.f32.mrb[0].mxu0
        %v2182 = vadd.f32 %v1547, %v2181
        %v2183 = vpop.f32.mrb[0].mxu0
        %2184 = vmatprep.mubr.bf16.mxu0 0
        %2185 = vmatmul.mubr.bf16.gmra.mrb[0].mxu0 %v1467
        %v2186 = vpop.f32.mrb[0].mxu0
        %v2187 = vadd.f32 %v1547, %v2186
        %v2188 = vpop.f32.mrb[0].mxu0
        %v2189 = vpop.f32.mrb[0].mxu0
        %v2190 = vadd.f32 %v1547, %v2189
        %v2191 = vpop.f32.mrb[0].mxu0
        %2192 = vmatprep.mubr.bf16.mxu0 0
        %2193 = vmatmul.mubr.bf16.gmra.mrb[0].mxu0 %v1468
        %v2194 = vpop.f32.mrb[0].mxu0
        %v2195 = vadd.f32 %v1547, %v2194
        %v2196 = vpop.f32.mrb[0].mxu0
        %v2197 = vpop.f32.mrb[0].mxu0
        %v2198 = vadd.f32 %v1547, %v2197
        %v2199 = vpop.f32.mrb[0].mxu0
        %2200 = vmatprep.mubr.bf16.mxu0 0
        %2201 = vmatmul.mubr.bf16.gmra.mrb[0].mxu0 %v1469
        %v2202 = vpop.f32.mrb[0].mxu0
        %v2203 = vadd.f32 %v1547, %v2202
        %v2204 = vpop.f32.mrb[0].mxu0
        %v2205 = vpop.f32.mrb[0].mxu0
        %v2206 = vadd.f32 %v1547, %v2205
        %v2207 = vpop.f32.mrb[0].mxu0
        %2208 = vmatprep.mubr.bf16.mxu0 0
        %2209 = vmatmul.mubr.bf16.gmra.mrb[0].mxu0 %v1470
        %v2210 = vpop.f32.mrb[0].mxu0
        %v2211 = vadd.f32 %v1547, %v2210
        %v2212 = vpop.f32.mrb[0].mxu0
        %v2213 = vpop.f32.mrb[0].mxu0
        %v2214 = vadd.f32 %v1547, %v2213
        %v2215 = vpop.f32.mrb[0].mxu0
        %2216 = vmatprep.mubr.bf16.mxu0 0
        %2217 = vmatmul.mubr.bf16.gmra.mrb[0].mxu0 %v1471
        %v2218 = vpop.f32.mrb[0].mxu0
        %v2219 = vadd.f32 %v1547, %v2218
        %v2220 = vpop.f32.mrb[0].mxu0
        %v2221 = vpop.f32.mrb[0].mxu0
        %v2222 = vadd.f32 %v1547, %v2221
        %v2223 = vpop.f32.mrb[0].mxu0
        %2224 = vmatprep.mubr.bf16.mxu0 0
        %2225 = vmatmul.mubr.bf16.gmra.mrb[0].mxu0 %v1472
        %v2226 = vpop.f32.mrb[0].mxu0
        %v2227 = vadd.f32 %v1547, %v2226
        %v2228 = vpop.f32.mrb[0].mxu0
        %v2229 = vpop.f32.mrb[0].mxu0
        %v2230 = vadd.f32 %v1547, %v2229
        %v2231 = vpop.f32.mrb[0].mxu0
        %2232 = vmatprep.mubr.bf16.mxu0 0
        %2233 = vmatmul.mubr.bf16.gmra.mrb[0].mxu0 %v1473
        %v2234 = vpop.f32.mrb[0].mxu0
        %v2235 = vadd.f32 %v1547, %v2234
        %v2236 = vpop.f32.mrb[0].mxu0
        %v2237 = vpop.f32.mrb[0].mxu0
        %v2238 = vadd.f32 %v1547, %v2237
        %v2239 = vpop.f32.mrb[0].mxu0
        %2240 = vmatprep.mubr.bf16.mxu0 0
        %2241 = vmatmul.mubr.bf16.gmra.mrb[0].mxu0 %v1474
        %v2242 = vpop.f32.mrb[0].mxu0
        %v2243 = vadd.f32 %v1547, %v2242
        %v2244 = vpop.f32.mrb[0].mxu0
        %v2245 = vpop.f32.mrb[0].mxu0
        %v2246 = vadd.f32 %v1547, %v2245
        %v2247 = vpop.f32.mrb[0].mxu0
        %2248 = vmatprep.mubr.bf16.mxu0 0
        %2249 = vmatmul.mubr.bf16.gmra.mrb[0].mxu0 %v1475
        %v2250 = vpop.f32.mrb[0].mxu0
        %v2251 = vadd.f32 %v1547, %v2250
        %v2252 = vpop.f32.mrb[0].mxu0
        %v2253 = vpop.f32.mrb[0].mxu0
        %v2254 = vadd.f32 %v1547, %v2253
        %v2255 = vpop.f32.mrb[0].mxu0
        %2256 = vmatprep.mubr.bf16.mxu0 0
        %2257 = vmatmul.mubr.bf16.gmra.mrb[0].mxu0 %v1476
        %v2258 = vpop.f32.mrb[0].mxu0
        %v2259 = vadd.f32 %v1547, %v2258
        %v2260 = vpop.f32.mrb[0].mxu0
        %v2261 = vpop.f32.mrb[0].mxu0
        %v2262 = vadd.f32 %v1547, %v2261
        %v2263 = vpop.f32.mrb[0].mxu0
        %2264 = vmatprep.mubr.bf16.mxu0 0
        %2265 = vmatmul.mubr.bf16.gmra.mrb[0].mxu0 %v1477
        %v2266 = vpop.f32.mrb[0].mxu0
        %v2267 = vadd.f32 %v1547, %v2266
        %v2268 = vpop.f32.mrb[0].mxu0
        %v2269 = vpop.f32.mrb[0].mxu0
        %v2270 = vadd.f32 %v1547, %v2269
        %v2271 = vpop.f32.mrb[0].mxu0
        %2272 = vmatprep.mubr.bf16.mxu0 0
        %2273 = vmatmul.mubr.bf16.gmra.mrb[0].mxu0 %v1478
        %v2274 = vpop.f32.mrb[0].mxu0
        %v2275 = vadd.f32 %v1547, %v2274
        %v2276 = vpop.f32.mrb[0].mxu0
        %v2277 = vpop.f32.mrb[0].mxu0
        %v2278 = vadd.f32 %v1547, %v2277
        %v2279 = vpop.f32.mrb[0].mxu0
        %2280 = vmatprep.mubr.bf16.mxu0 0
        %2281 = vmatmul.mubr.bf16.gmra.mrb[0].mxu0 %v1479
        %v2282 = vpop.f32.mrb[0].mxu0
        %v2283 = vadd.f32 %v1547, %v2282
        %v2284 = vpop.f32.mrb[0].mxu0
        %v2285 = vpop.f32.mrb[0].mxu0
        %v2286 = vadd.f32 %v1547, %v2285
        %v2287 = vpop.f32.mrb[0].mxu0
        %2288 = vmatprep.mubr.bf16.mxu0 0
        %2289 = vmatmul.mubr.bf16.gmra.mrb[0].mxu0 %v1480
        %v2290 = vpop.f32.mrb[0].mxu0
        %v2291 = vadd.f32 %v1547, %v2290
        %v2292 = vpop.f32.mrb[0].mxu0
        %v2293 = vpop.f32.mrb[0].mxu0
        %v2294 = vadd.f32 %v1547, %v2293
        %v2295 = vpop.f32.mrb[0].mxu0
        %2296 = vmatprep.mubr.bf16.mxu0 0
        %2297 = vmatmul.mubr.bf16.gmra.mrb[0].mxu0 %v1481
        %v2298 = vpop.f32.mrb[0].mxu0
        %v2299 = vadd.f32 %v1547, %v2298
        %v2300 = vpop.f32.mrb[0].mxu0
        %v2301 = vpop.f32.mrb[0].mxu0
        %v2302 = vadd.f32 %v1547, %v2301
        %v2303 = vpop.f32.mrb[0].mxu0
        %2304 = vmatprep.mubr.bf16.mxu0 0
        %2305 = vmatmul.mubr.bf16.gmra.mrb[0].mxu0 %v1482
        %v2306 = vpop.f32.mrb[0].mxu0
        %v2307 = vadd.f32 %v1547, %v2306
        %v2308 = vpop.f32.mrb[0].mxu0
        %v2309 = vpop.f32.mrb[0].mxu0
        %v2310 = vadd.f32 %v1547, %v2309
        %v2311 = vpop.f32.mrb[0].mxu0
        %2312 = vmatprep.mubr.bf16.mxu0 0
        %2313 = vmatmul.mubr.bf16.gmra.mrb[0].mxu0 %v1483
        %v2314 = vpop.f32.mrb[0].mxu0
        %v2315 = vadd.f32 %v1547, %v2314
        %v2316 = vpop.f32.mrb[0].mxu0
        %v2317 = vpop.f32.mrb[0].mxu0
        %v2318 = vadd.f32 %v1547, %v2317
        %v2319 = vpop.f32.mrb[0].mxu0
        %2320 = vmatprep.mubr.bf16.mxu0 0
        %2321 = vmatmul.mubr.bf16.gmra.mrb[0].mxu0 %v1484
        %v2322 = vpop.f32.mrb[0].mxu0
        %v2323 = vadd.f32 %v1547, %v2322
        %v2324 = vpop.f32.mrb[0].mxu0
        %v2325 = vpop.f32.mrb[0].mxu0
        %v2326 = vadd.f32 %v1547, %v2325
        %v2327 = vpop.f32.mrb[0].mxu0
        %2328 = vmatprep.mubr.bf16.mxu0 0
        %2329 = vmatmul.mubr.bf16.gmra.mrb[0].mxu0 %v1485
        %v2330 = vpop.f32.mrb[0].mxu0
        %v2331 = vadd.f32 %v1547, %v2330
        %v2332 = vpop.f32.mrb[0].mxu0
        %v2333 = vpop.f32.mrb[0].mxu0
        %v2334 = vadd.f32 %v1547, %v2333
        %v2335 = vpop.f32.mrb[0].mxu0
        %2336 = vmatprep.mubr.bf16.mxu0 0
        %2337 = vmatmul.mubr.bf16.gmra.mrb[0].mxu0 %v1486
        %v2338 = vpop.f32.mrb[0].mxu0
        %v2339 = vadd.f32 %v1547, %v2338
        %v2340 = vpop.f32.mrb[0].mxu0
        %v2341 = vpop.f32.mrb[0].mxu0
        %v2342 = vadd.f32 %v1547, %v2341
        %v2343 = vpop.f32.mrb[0].mxu0
        %2344 = vmatprep.mubr.bf16.mxu0 0
        %2345 = vmatmul.mubr.bf16.gmra.mrb[0].mxu0 %v1487
        %v2346 = vpop.f32.mrb[0].mxu0
        %v2347 = vadd.f32 %v1547, %v2346
        %v2348 = vpop.f32.mrb[0].mxu0
        %v2349 = vpop.f32.mrb[0].mxu0
        %v2350 = vadd.f32 %v1547, %v2349
        %v2351 = vpop.f32.mrb[0].mxu0
        %2352 = vmatprep.mubr.bf16.mxu0 0
        %2353 = vmatmul.mubr.bf16.gmra.mrb[0].mxu0 %v1488
        %v2354 = vpop.f32.mrb[0].mxu0
        %v2355 = vadd.f32 %v1547, %v2354
        %v2356 = vpop.f32.mrb[0].mxu0
        %v2357 = vpop.f32.mrb[0].mxu0
        %v2358 = vadd.f32 %v1547, %v2357
        %v2359 = vpop.f32.mrb[0].mxu0
        %2360 = vmatprep.mubr.bf16.mxu0 0
        %2361 = vmatmul.mubr.bf16.gmra.mrb[0].mxu0 %v1489
        %v2362 = vpop.f32.mrb[0].mxu0
        %v2363 = vadd.f32 %v1547, %v2362
        %v2364 = vpop.f32.mrb[0].mxu0
        %v2365 = vpop.f32.mrb[0].mxu0
        %v2366 = vadd.f32 %v1547, %v2365
        %v2367 = vpop.f32.mrb[0].mxu0
        %2368 = vmatprep.mubr.bf16.mxu0 0
        %2369 = vmatmul.mubr.bf16.gmra.mrb[0].mxu0 %v1490
        %v2370 = vpop.f32.mrb[0].mxu0
        %v2371 = vadd.f32 %v1547, %v2370
        %v2372 = vpop.f32.mrb[0].mxu0
        %v2373 = vpop.f32.mrb[0].mxu0
        %v2374 = vadd.f32 %v1547, %v2373
        %v2375 = vpop.f32.mrb[0].mxu0
        %2376 = vmatprep.mubr.bf16.mxu0 0
        %2377 = vmatmul.mubr.bf16.gmra.mrb[0].mxu0 %v1491
        %v2378 = vpop.f32.mrb[0].mxu0
        %v2379 = vadd.f32 %v1547, %v2378
        %v2380 = vpop.f32.mrb[0].mxu0
        %v2381 = vpop.f32.mrb[0].mxu0
        %v2382 = vadd.f32 %v1547, %v2381
        %v2383 = vpop.f32.mrb[0].mxu0
        %2384 = vmatprep.mubr.bf16.mxu0 0
        %2385 = vmatmul.mubr.bf16.gmra.mrb[0].mxu0 %v1492
        %v2386 = vpop.f32.mrb[0].mxu0
        %v2387 = vadd.f32 %v1547, %v2386
        %v2388 = vpop.f32.mrb[0].mxu0
        %v2389 = vpop.f32.mrb[0].mxu0
        %v2390 = vadd.f32 %v1547, %v2389
        %v2391 = vpop.f32.mrb[0].mxu0
        %2392 = vmatprep.mubr.bf16.mxu0 0
        %2393 = vmatmul.mubr.bf16.gmra.mrb[0].mxu0 %v1493
        %v2394 = vpop.f32.mrb[0].mxu0
        %v2395 = vadd.f32 %v1547, %v2394
        %v2396 = vpop.f32.mrb[0].mxu0
        %v2397 = vpop.f32.mrb[0].mxu0
        %v2398 = vadd.f32 %v1547, %v2397
        %v2399 = vpop.f32.mrb[0].mxu0
        %2400 = vmatprep.mubr.bf16.mxu0 0
        %2401 = vmatmul.mubr.bf16.gmra.mrb[0].mxu0 %v1494
        %v2402 = vpop.f32.mrb[0].mxu0
        %v2403 = vadd.f32 %v1547, %v2402
        %v2404 = vpop.f32.mrb[0].mxu0
        %v2405 = vpop.f32.mrb[0].mxu0
        %v2406 = vadd.f32 %v1547, %v2405
        %v2407 = vpop.f32.mrb[0].mxu0
        %2408 = vmatprep.mubr.bf16.mxu0 0
        %2409 = vmatmul.mubr.bf16.gmra.mrb[0].mxu0 %v1495
        %v2410 = vpop.f32.mrb[0].mxu0
        %v2411 = vadd.f32 %v1547, %v2410
        %v2412 = vpop.f32.mrb[0].mxu0
        %v2413 = vpop.f32.mrb[0].mxu0
        %v2414 = vadd.f32 %v1547, %v2413
        %v2415 = vpop.f32.mrb[0].mxu0
        %2416 = vmatprep.mubr.bf16.mxu0 0
        %2417 = vmatmul.mubr.bf16.gmra.mrb[0].mxu0 %v1496
        %v2418 = vpop.f32.mrb[0].mxu0
        %v2419 = vadd.f32 %v1547, %v2418
        %v2420 = vpop.f32.mrb[0].mxu0
        %v2421 = vpop.f32.mrb[0].mxu0
        %v2422 = vadd.f32 %v1547, %v2421
        %v2423 = vpop.f32.mrb[0].mxu0
        %2424 = vmatprep.mubr.bf16.mxu0 0
        %2425 = vmatmul.mubr.bf16.gmra.mrb[0].mxu0 %v1497
        %v2426 = vpop.f32.mrb[0].mxu0
        %v2427 = vadd.f32 %v1547, %v2426
        %v2428 = vpop.f32.mrb[0].mxu0
        %v2429 = vpop.f32.mrb[0].mxu0
        %v2430 = vadd.f32 %v1547, %v2429
        %v2431 = vpop.f32.mrb[0].mxu0
        %2432 = vmatprep.mubr.bf16.mxu0 0
        %2433 = vmatmul.mubr.bf16.gmra.mrb[0].mxu0 %v1498
        %v2434 = vpop.f32.mrb[0].mxu0
        %v2435 = vadd.f32 %v1547, %v2434
        %v2436 = vpop.f32.mrb[0].mxu0
        %v2437 = vpop.f32.mrb[0].mxu0
        %v2438 = vadd.f32 %v1547, %v2437
        %v2439 = vpop.f32.mrb[0].mxu0
        %2440 = vmatprep.mubr.bf16.mxu0 0
        %2441 = vmatmul.mubr.bf16.gmra.mrb[0].mxu0 %v1499
        %v2442 = vpop.f32.mrb[0].mxu0
        %v2443 = vadd.f32 %v1547, %v2442
        %v2444 = vpop.f32.mrb[0].mxu0
        %v2445 = vpop.f32.mrb[0].mxu0
        %v2446 = vadd.f32 %v1547, %v2445
        %v2447 = vpop.f32.mrb[0].mxu0
        %2448 = vmatprep.mubr.bf16.mxu0 0
        %2449 = vmatmul.mubr.bf16.gmra.mrb[0].mxu0 %v1500
        %v2450 = vpop.f32.mrb[0].mxu0
        %v2451 = vadd.f32 %v1547, %v2450
        %v2452 = vpop.f32.mrb[0].mxu0
        %v2453 = vpop.f32.mrb[0].mxu0
        %v2454 = vadd.f32 %v1547, %v2453
        %v2455 = vpop.f32.mrb[0].mxu0
        %2456 = vmatprep.mubr.bf16.mxu0 0
        %2457 = vmatmul.mubr.bf16.gmra.mrb[0].mxu0 %v1501
        %v2458 = vpop.f32.mrb[0].mxu0
        %v2459 = vadd.f32 %v1547, %v2458
        %v2460 = vpop.f32.mrb[0].mxu0
        %v2461 = vpop.f32.mrb[0].mxu0
        %v2462 = vadd.f32 %v1547, %v2461
        %v2463 = vpop.f32.mrb[0].mxu0
        %2464 = vdwg.mxu0
        %2465 = vst [vmem:[%s343] sm:$0x3f] %v1714
        %2466 = vst [vmem:[%s343 + $0x8] sm:$0x3f] %v1716
        %vm2467 = vcmask 357376
        %2468 = vst.msk [vmem:[%s343 + $0x10] sm:$0x3f] %vm2467, %v2147
        %2469 = vst [vmem:[%s343 + $0x18] sm:$0x3f] %v1718
        %2470 = vst [vmem:[%s343 + $0x20] sm:$0x3f] %v1720
        %2471 = vst.msk [vmem:[%s343 + $0x28] sm:$0x3f] %vm2467, %v2150
        %2472 = vst [vmem:[%s343 + $0x30] sm:$0x3f] %v1724
        %2473 = vst [vmem:[%s343 + $0x38] sm:$0x3f] %v1726
        %2474 = vst.msk [vmem:[%s343 + $0x40] sm:$0x3f] %vm2467, %v2155
        %2475 = vst [vmem:[%s343 + $0x48] sm:$0x3f] %v1728
        %2476 = vst [vmem:[%s343 + $0x50] sm:$0x3f] %v1730
        %2477 = vst.msk [vmem:[%s343 + $0x58] sm:$0x3f] %vm2467, %v2158
        %2478 = vst [vmem:[%s343 + $0x60] sm:$0x3f] %v1734
        %2479 = vst [vmem:[%s343 + $0x68] sm:$0x3f] %v1736
        %2480 = vst.msk [vmem:[%s343 + $0x70] sm:$0x3f] %vm2467, %v2163
        %2481 = vst [vmem:[%s343 + $0x78] sm:$0x3f] %v1738
        %2482 = vst [vmem:[%s343 + $0x80] sm:$0x3f] %v1740
        %2483 = vst.msk [vmem:[%s343 + $0x88] sm:$0x3f] %vm2467, %v2166
        %2484 = vst [vmem:[%s343 + $0x90] sm:$0x3f] %v1744
        %2485 = vst [vmem:[%s343 + $0x98] sm:$0x3f] %v1746
        %2486 = vst.msk [vmem:[%s343 + $0xa0] sm:$0x3f] %vm2467, %v2171
        %2487 = vst [vmem:[%s343 + $0xa8] sm:$0x3f] %v1748
        %2488 = vst [vmem:[%s343 + $0xb0] sm:$0x3f] %v1750
        %2489 = vst.msk [vmem:[%s343 + $0xb8] sm:$0x3f] %vm2467, %v2174
        %2490 = vst [vmem:[%s343 + $0xc0] sm:$0x3f] %v1754
        %2491 = vst [vmem:[%s343 + $0xc8] sm:$0x3f] %v1756
        %2492 = vst.msk [vmem:[%s343 + $0xd0] sm:$0x3f] %vm2467, %v2179
        %2493 = vst [vmem:[%s343 + $0xd8] sm:$0x3f] %v1758
        %2494 = vst [vmem:[%s343 + $0xe0] sm:$0x3f] %v1760
        %2495 = vst.msk [vmem:[%s343 + $0xe8] sm:$0x3f] %vm2467, %v2182
        %2496 = vst [vmem:[%s343 + $0xf0] sm:$0x3f] %v1764
        %2497 = vst [vmem:[%s343 + $0xf8] sm:$0x3f] %v1766
        %2498 = vst.msk [vmem:[%s343 + $0x100] sm:$0x3f] %vm2467, %v2187
        %2499 = vst [vmem:[%s343 + $0x108] sm:$0x3f] %v1768
        %2500 = vst [vmem:[%s343 + $0x110] sm:$0x3f] %v1770
        %2501 = vst.msk [vmem:[%s343 + $0x118] sm:$0x3f] %vm2467, %v2190
        %2502 = vst [vmem:[%s343 + $0x120] sm:$0x3f] %v1774
        %2503 = vst [vmem:[%s343 + $0x128] sm:$0x3f] %v1776
        %2504 = vst.msk [vmem:[%s343 + $0x130] sm:$0x3f] %vm2467, %v2195
        %2505 = vst [vmem:[%s343 + $0x138] sm:$0x3f] %v1778
        %2506 = vst [vmem:[%s343 + $0x140] sm:$0x3f] %v1780
        %2507 = vst.msk [vmem:[%s343 + $0x148] sm:$0x3f] %vm2467, %v2198
        %2508 = vst [vmem:[%s343 + $0x150] sm:$0x3f] %v1784
        %2509 = vst [vmem:[%s343 + $0x158] sm:$0x3f] %v1786
        %2510 = vst.msk [vmem:[%s343 + $0x160] sm:$0x3f] %vm2467, %v2203
        %2511 = vst [vmem:[%s343 + $0x168] sm:$0x3f] %v1788
        %2512 = vst [vmem:[%s343 + $0x170] sm:$0x3f] %v1790
        %2513 = vst.msk [vmem:[%s343 + $0x178] sm:$0x3f] %vm2467, %v2206
        %2514 = vst [vmem:[%s343 + $0x180] sm:$0x3f] %v1794
        %2515 = vst [vmem:[%s343 + $0x188] sm:$0x3f] %v1796
        %2516 = vst.msk [vmem:[%s343 + $0x190] sm:$0x3f] %vm2467, %v2211
        %2517 = vst [vmem:[%s343 + $0x198] sm:$0x3f] %v1798
        %2518 = vst [vmem:[%s343 + $0x1a0] sm:$0x3f] %v1800
        %2519 = vst.msk [vmem:[%s343 + $0x1a8] sm:$0x3f] %vm2467, %v2214
        %2520 = vst [vmem:[%s343 + $0x1b0] sm:$0x3f] %v1804
        %2521 = vst [vmem:[%s343 + $0x1b8] sm:$0x3f] %v1806
        %2522 = vst.msk [vmem:[%s343 + $0x1c0] sm:$0x3f] %vm2467, %v2219
        %2523 = vst [vmem:[%s343 + $0x1c8] sm:$0x3f] %v1808
        %2524 = vst [vmem:[%s343 + $0x1d0] sm:$0x3f] %v1810
        %2525 = vst.msk [vmem:[%s343 + $0x1d8] sm:$0x3f] %vm2467, %v2222
        %2526 = vst [vmem:[%s343 + $0x1e0] sm:$0x3f] %v1814
        %2527 = vst [vmem:[%s343 + $0x1e8] sm:$0x3f] %v1816
        %2528 = vst.msk [vmem:[%s343 + $0x1f0] sm:$0x3f] %vm2467, %v2227
        %2529 = vst [vmem:[%s343 + $0x1f8] sm:$0x3f] %v1818
        %2530 = vst [vmem:[%s343 + $0x200] sm:$0x3f] %v1820
        %2531 = vst.msk [vmem:[%s343 + $0x208] sm:$0x3f] %vm2467, %v2230
        %2532 = vst [vmem:[%s343 + $0x210] sm:$0x3f] %v1824
        %2533 = vst [vmem:[%s343 + $0x218] sm:$0x3f] %v1826
        %2534 = vst.msk [vmem:[%s343 + $0x220] sm:$0x3f] %vm2467, %v2235
        %2535 = vst [vmem:[%s343 + $0x228] sm:$0x3f] %v1828
        %2536 = vst [vmem:[%s343 + $0x230] sm:$0x3f] %v1830
        %2537 = vst.msk [vmem:[%s343 + $0x238] sm:$0x3f] %vm2467, %v2238
        %2538 = vst [vmem:[%s343 + $0x240] sm:$0x3f] %v1834
        %2539 = vst [vmem:[%s343 + $0x248] sm:$0x3f] %v1836
        %2540 = vst.msk [vmem:[%s343 + $0x250] sm:$0x3f] %vm2467, %v2243
        %2541 = vst [vmem:[%s343 + $0x258] sm:$0x3f] %v1838
        %2542 = vst [vmem:[%s343 + $0x260] sm:$0x3f] %v1840
        %2543 = vst.msk [vmem:[%s343 + $0x268] sm:$0x3f] %vm2467, %v2246
        %2544 = vst [vmem:[%s343 + $0x270] sm:$0x3f] %v1844
        %2545 = vst [vmem:[%s343 + $0x278] sm:$0x3f] %v1846
        %2546 = vst.msk [vmem:[%s343 + $0x280] sm:$0x3f] %vm2467, %v2251
        %2547 = vst [vmem:[%s343 + $0x288] sm:$0x3f] %v1848
        %2548 = vst [vmem:[%s343 + $0x290] sm:$0x3f] %v1850
        %2549 = vst.msk [vmem:[%s343 + $0x298] sm:$0x3f] %vm2467, %v2254
        %2550 = vst [vmem:[%s343 + $0x2a0] sm:$0x3f] %v1854
        %2551 = vst [vmem:[%s343 + $0x2a8] sm:$0x3f] %v1856
        %2552 = vst.msk [vmem:[%s343 + $0x2b0] sm:$0x3f] %vm2467, %v2259
        %2553 = vst [vmem:[%s343 + $0x2b8] sm:$0x3f] %v1858
        %2554 = vst [vmem:[%s343 + $0x2c0] sm:$0x3f] %v1860
        %2555 = vst.msk [vmem:[%s343 + $0x2c8] sm:$0x3f] %vm2467, %v2262
        %2556 = vst [vmem:[%s343 + $0x2d0] sm:$0x3f] %v1864
        %2557 = vst [vmem:[%s343 + $0x2d8] sm:$0x3f] %v1866
        %2558 = vst.msk [vmem:[%s343 + $0x2e0] sm:$0x3f] %vm2467, %v2267
        %2559 = vst [vmem:[%s343 + $0x2e8] sm:$0x3f] %v1868
        %2560 = vst [vmem:[%s343 + $0x2f0] sm:$0x3f] %v1870
        %2561 = vst.msk [vmem:[%s343 + $0x2f8] sm:$0x3f] %vm2467, %v2270
        %2562 = vst [vmem:[%s343 + $0x300] sm:$0x3f] %v1874
        %2563 = vst [vmem:[%s343 + $0x308] sm:$0x3f] %v1876
        %2564 = vst.msk [vmem:[%s343 + $0x310] sm:$0x3f] %vm2467, %v2275
        %2565 = vst [vmem:[%s343 + $0x318] sm:$0x3f] %v1878
        %2566 = vst [vmem:[%s343 + $0x320] sm:$0x3f] %v1880
        %2567 = vst.msk [vmem:[%s343 + $0x328] sm:$0x3f] %vm2467, %v2278
        %2568 = vst [vmem:[%s343 + $0x330] sm:$0x3f] %v1884
        %2569 = vst [vmem:[%s343 + $0x338] sm:$0x3f] %v1886
        %2570 = vst.msk [vmem:[%s343 + $0x340] sm:$0x3f] %vm2467, %v2283
        %2571 = vst [vmem:[%s343 + $0x348] sm:$0x3f] %v1888
        %2572 = vst [vmem:[%s343 + $0x350] sm:$0x3f] %v1890
        %2573 = vst.msk [vmem:[%s343 + $0x358] sm:$0x3f] %vm2467, %v2286
        %2574 = vst [vmem:[%s343 + $0x360] sm:$0x3f] %v1894
        %2575 = vst [vmem:[%s343 + $0x368] sm:$0x3f] %v1896
        %2576 = vst.msk [vmem:[%s343 + $0x370] sm:$0x3f] %vm2467, %v2291
        %2577 = vst [vmem:[%s343 + $0x378] sm:$0x3f] %v1898
        %2578 = vst [vmem:[%s343 + $0x380] sm:$0x3f] %v1900
        %2579 = vst.msk [vmem:[%s343 + $0x388] sm:$0x3f] %vm2467, %v2294
        %2580 = vst [vmem:[%s343 + $0x390] sm:$0x3f] %v1904
        %2581 = vst [vmem:[%s343 + $0x398] sm:$0x3f] %v1906
        %2582 = vst.msk [vmem:[%s343 + $0x3a0] sm:$0x3f] %vm2467, %v2299
        %2583 = vst [vmem:[%s343 + $0x3a8] sm:$0x3f] %v1908
        %2584 = vst [vmem:[%s343 + $0x3b0] sm:$0x3f] %v1910
        %2585 = vst.msk [vmem:[%s343 + $0x3b8] sm:$0x3f] %vm2467, %v2302
        %2586 = vst [vmem:[%s343 + $0x3c0] sm:$0x3f] %v1914
        %2587 = vst [vmem:[%s343 + $0x3c8] sm:$0x3f] %v1916
        %2588 = vst.msk [vmem:[%s343 + $0x3d0] sm:$0x3f] %vm2467, %v2307
        %2589 = vst [vmem:[%s343 + $0x3d8] sm:$0x3f] %v1918
        %2590 = vst [vmem:[%s343 + $0x3e0] sm:$0x3f] %v1920
        %2591 = vst.msk [vmem:[%s343 + $0x3e8] sm:$0x3f] %vm2467, %v2310
        %2592 = vst [vmem:[%s343 + $0x3f0] sm:$0x3f] %v1924
        %2593 = vst [vmem:[%s343 + $0x3f8] sm:$0x3f] %v1926
        %2594 = vst.msk [vmem:[%s343 + $0x400] sm:$0x3f] %vm2467, %v2315
        %2595 = vst [vmem:[%s343 + $0x408] sm:$0x3f] %v1928
        %2596 = vst [vmem:[%s343 + $0x410] sm:$0x3f] %v1930
        %2597 = vst.msk [vmem:[%s343 + $0x418] sm:$0x3f] %vm2467, %v2318
        %2598 = vst [vmem:[%s343 + $0x420] sm:$0x3f] %v1934
        %2599 = vst [vmem:[%s343 + $0x428] sm:$0x3f] %v1936
        %2600 = vst.msk [vmem:[%s343 + $0x430] sm:$0x3f] %vm2467, %v2323
        %2601 = vst [vmem:[%s343 + $0x438] sm:$0x3f] %v1938
        %2602 = vst [vmem:[%s343 + $0x440] sm:$0x3f] %v1940
        %2603 = vst.msk [vmem:[%s343 + $0x448] sm:$0x3f] %vm2467, %v2326
        %2604 = vst [vmem:[%s343 + $0x450] sm:$0x3f] %v1944
        %2605 = vst [vmem:[%s343 + $0x458] sm:$0x3f] %v1946
        %2606 = vst.msk [vmem:[%s343 + $0x460] sm:$0x3f] %vm2467, %v2331
        %2607 = vst [vmem:[%s343 + $0x468] sm:$0x3f] %v1948
        %2608 = vst [vmem:[%s343 + $0x470] sm:$0x3f] %v1950
        %2609 = vst.msk [vmem:[%s343 + $0x478] sm:$0x3f] %vm2467, %v2334
        %2610 = vst [vmem:[%s343 + $0x480] sm:$0x3f] %v1954
        %2611 = vst [vmem:[%s343 + $0x488] sm:$0x3f] %v1956
        %2612 = vst.msk [vmem:[%s343 + $0x490] sm:$0x3f] %vm2467, %v2339
        %2613 = vst [vmem:[%s343 + $0x498] sm:$0x3f] %v1958
        %2614 = vst [vmem:[%s343 + $0x4a0] sm:$0x3f] %v1960
        %2615 = vst.msk [vmem:[%s343 + $0x4a8] sm:$0x3f] %vm2467, %v2342
        %2616 = vst [vmem:[%s343 + $0x4b0] sm:$0x3f] %v1964
        %2617 = vst [vmem:[%s343 + $0x4b8] sm:$0x3f] %v1966
        %2618 = vst.msk [vmem:[%s343 + $0x4c0] sm:$0x3f] %vm2467, %v2347
        %2619 = vst [vmem:[%s343 + $0x4c8] sm:$0x3f] %v1968
        %2620 = vst [vmem:[%s343 + $0x4d0] sm:$0x3f] %v1970
        %2621 = vst.msk [vmem:[%s343 + $0x4d8] sm:$0x3f] %vm2467, %v2350
        %2622 = vst [vmem:[%s343 + $0x4e0] sm:$0x3f] %v1974
        %2623 = vst [vmem:[%s343 + $0x4e8] sm:$0x3f] %v1976
        %2624 = vst.msk [vmem:[%s343 + $0x4f0] sm:$0x3f] %vm2467, %v2355
        %2625 = vst [vmem:[%s343 + $0x4f8] sm:$0x3f] %v1978
        %2626 = vst [vmem:[%s343 + $0x500] sm:$0x3f] %v1980
        %2627 = vst.msk [vmem:[%s343 + $0x508] sm:$0x3f] %vm2467, %v2358
        %2628 = vst [vmem:[%s343 + $0x510] sm:$0x3f] %v1984
        %2629 = vst [vmem:[%s343 + $0x518] sm:$0x3f] %v1986
        %2630 = vst.msk [vmem:[%s343 + $0x520] sm:$0x3f] %vm2467, %v2363
        %2631 = vst [vmem:[%s343 + $0x528] sm:$0x3f] %v1988
        %2632 = vst [vmem:[%s343 + $0x530] sm:$0x3f] %v1990
        %2633 = vst.msk [vmem:[%s343 + $0x538] sm:$0x3f] %vm2467, %v2366
        %2634 = vst [vmem:[%s343 + $0x540] sm:$0x3f] %v1994
        %2635 = vst [vmem:[%s343 + $0x548] sm:$0x3f] %v1996
        %2636 = vst.msk [vmem:[%s343 + $0x550] sm:$0x3f] %vm2467, %v2371
        %2637 = vst [vmem:[%s343 + $0x558] sm:$0x3f] %v1998
        %2638 = vst [vmem:[%s343 + $0x560] sm:$0x3f] %v2000
        %2639 = vst.msk [vmem:[%s343 + $0x568] sm:$0x3f] %vm2467, %v2374
        %2640 = vst [vmem:[%s343 + $0x570] sm:$0x3f] %v2004
        %2641 = vst [vmem:[%s343 + $0x578] sm:$0x3f] %v2006
        %2642 = vst.msk [vmem:[%s343 + $0x580] sm:$0x3f] %vm2467, %v2379
        %2643 = vst [vmem:[%s343 + $0x588] sm:$0x3f] %v2008
        %2644 = vst [vmem:[%s343 + $0x590] sm:$0x3f] %v2010
        %2645 = vst.msk [vmem:[%s343 + $0x598] sm:$0x3f] %vm2467, %v2382
        %2646 = vst [vmem:[%s343 + $0x5a0] sm:$0x3f] %v2014
        %2647 = vst [vmem:[%s343 + $0x5a8] sm:$0x3f] %v2016
        %2648 = vst.msk [vmem:[%s343 + $0x5b0] sm:$0x3f] %vm2467, %v2387
        %2649 = vst [vmem:[%s343 + $0x5b8] sm:$0x3f] %v2018
        %2650 = vst [vmem:[%s343 + $0x5c0] sm:$0x3f] %v2020
        %2651 = vst.msk [vmem:[%s343 + $0x5c8] sm:$0x3f] %vm2467, %v2390
        %2652 = vst [vmem:[%s343 + $0x5d0] sm:$0x3f] %v2024
        %2653 = vst [vmem:[%s343 + $0x5d8] sm:$0x3f] %v2026
        %2654 = vst.msk [vmem:[%s343 + $0x5e0] sm:$0x3f] %vm2467, %v2395
        %2655 = vst [vmem:[%s343 + $0x5e8] sm:$0x3f] %v2028
        %2656 = vst [vmem:[%s343 + $0x5f0] sm:$0x3f] %v2030
        %2657 = vst.msk [vmem:[%s343 + $0x5f8] sm:$0x3f] %vm2467, %v2398
        %2658 = vst [vmem:[%s343 + $0x600] sm:$0x3f] %v2034
        %2659 = vst [vmem:[%s343 + $0x608] sm:$0x3f] %v2036
        %2660 = vst.msk [vmem:[%s343 + $0x610] sm:$0x3f] %vm2467, %v2403
        %2661 = vst [vmem:[%s343 + $0x618] sm:$0x3f] %v2038
        %2662 = vst [vmem:[%s343 + $0x620] sm:$0x3f] %v2040
        %2663 = vst.msk [vmem:[%s343 + $0x628] sm:$0x3f] %vm2467, %v2406
        %2664 = vst [vmem:[%s343 + $0x630] sm:$0x3f] %v2044
        %2665 = vst [vmem:[%s343 + $0x638] sm:$0x3f] %v2046
        %2666 = vst.msk [vmem:[%s343 + $0x640] sm:$0x3f] %vm2467, %v2411
        %2667 = vst [vmem:[%s343 + $0x648] sm:$0x3f] %v2048
        %2668 = vst [vmem:[%s343 + $0x650] sm:$0x3f] %v2050
        %2669 = vst.msk [vmem:[%s343 + $0x658] sm:$0x3f] %vm2467, %v2414
        %2670 = vst [vmem:[%s343 + $0x660] sm:$0x3f] %v2054
        %2671 = vst [vmem:[%s343 + $0x668] sm:$0x3f] %v2056
        %2672 = vst.msk [vmem:[%s343 + $0x670] sm:$0x3f] %vm2467, %v2419
        %2673 = vst [vmem:[%s343 + $0x678] sm:$0x3f] %v2058
        %2674 = vst [vmem:[%s343 + $0x680] sm:$0x3f] %v2060
        %2675 = vst.msk [vmem:[%s343 + $0x688] sm:$0x3f] %vm2467, %v2422
        %2676 = vst [vmem:[%s343 + $0x690] sm:$0x3f] %v2064
        %2677 = vst [vmem:[%s343 + $0x698] sm:$0x3f] %v2066
        %2678 = vst.msk [vmem:[%s343 + $0x6a0] sm:$0x3f] %vm2467, %v2427
        %2679 = vst [vmem:[%s343 + $0x6a8] sm:$0x3f] %v2068
        %2680 = vst [vmem:[%s343 + $0x6b0] sm:$0x3f] %v2070
        %2681 = vst.msk [vmem:[%s343 + $0x6b8] sm:$0x3f] %vm2467, %v2430
        %2682 = vst [vmem:[%s343 + $0x6c0] sm:$0x3f] %v2074
        %2683 = vst [vmem:[%s343 + $0x6c8] sm:$0x3f] %v2076
        %2684 = vst.msk [vmem:[%s343 + $0x6d0] sm:$0x3f] %vm2467, %v2435
        %2685 = vst [vmem:[%s343 + $0x6d8] sm:$0x3f] %v2078
        %2686 = vst [vmem:[%s343 + $0x6e0] sm:$0x3f] %v2080
        %2687 = vst.msk [vmem:[%s343 + $0x6e8] sm:$0x3f] %vm2467, %v2438
        %2688 = vst [vmem:[%s343 + $0x6f0] sm:$0x3f] %v2084
        %2689 = vst [vmem:[%s343 + $0x6f8] sm:$0x3f] %v2086
        %2690 = vst.msk [vmem:[%s343 + $0x700] sm:$0x3f] %vm2467, %v2443
        %2691 = vst [vmem:[%s343 + $0x708] sm:$0x3f] %v2088
        %2692 = vst [vmem:[%s343 + $0x710] sm:$0x3f] %v2090
        %2693 = vst.msk [vmem:[%s343 + $0x718] sm:$0x3f] %vm2467, %v2446
        %2694 = vst [vmem:[%s343 + $0x720] sm:$0x3f] %v2094
        %2695 = vst [vmem:[%s343 + $0x728] sm:$0x3f] %v2096
        %2696 = vst.msk [vmem:[%s343 + $0x730] sm:$0x3f] %vm2467, %v2451
        %2697 = vst [vmem:[%s343 + $0x738] sm:$0x3f] %v2098
        %2698 = vst [vmem:[%s343 + $0x740] sm:$0x3f] %v2100
        %2699 = vst.msk [vmem:[%s343 + $0x748] sm:$0x3f] %vm2467, %v2454
        %2700 = vst [vmem:[%s343 + $0x750] sm:$0x3f] %v2104
        %2701 = vst [vmem:[%s343 + $0x758] sm:$0x3f] %v2106
        %2702 = vst.msk [vmem:[%s343 + $0x760] sm:$0x3f] %vm2467, %v2459
        %2703 = vst [vmem:[%s343 + $0x768] sm:$0x3f] %v2108
        %2704 = vst [vmem:[%s343 + $0x770] sm:$0x3f] %v2110
        %2705 = vst.msk [vmem:[%s343 + $0x778] sm:$0x3f] %vm2467, %v2462
        %s2706 = smul.u32 80, %s27
        %s2707 = smul.u32 3, %s28
        %p2708 = scmp.lt.s32.totalorder %s26, 1
        %s2709 = scalar_select %p2708, %s26, 1
        %p2710 = scmp.lt.s32.totalorder %s2706, 79
        %s2711 = scalar_select %p2710, %s2706, 79
        %p2712 = scmp.lt.s32.totalorder %s2707, 2
        %s2713 = scalar_select %p2712, %s2707, 2
        %s2714 = smul.addr %s2711, 3
        %s2715 = sadd.s32 %s2713, %s2714
        %s2716 = smul.addr %s2709, 240
        %s2717 = sadd.s32 %s2715, %s2716
        %s2718 = smul.addr %s2717, 8
        %s2719 = scalar_lea.vmem %s4, %s2718
        // Predicated region
        $region53: #{tpu_custom_call.1} parent=35 // pred_check
          %p2720 = pneg %p168
        $region54: #{tpu_custom_call.1} parent=35 // pred_check_branch
          %2722 = sbr.rel (%p2720) target = $region56
        $region55: #{tpu_custom_call.1} parent=35 // pred_region
          %s2723 = smul.u32 80, %s27
          %s2724 = smul.u32 3, %s28
        $region56: #{tpu_custom_call.1} parent=35 // pred_fallthru
          _
      $region36: #{tpu_custom_call.1} parent=5 // pred_fallthru
        _
      %p2725 = scmp.le.s32.totalorder 2, %s16
      // Predicated region
      $region57: #{tpu_custom_call.1} parent=5 // pred_check
        %p2726 = pneg %p2725
      $region58: #{tpu_custom_call.1} parent=5 // pred_check_branch
        %2728 = sbr.rel (%p2726) target = $region60
      $region59: #{tpu_custom_call.1} parent=5 // pred_region
        %s2729 = ssub.s32 %s16, 2
        // Predicated region
        $region61: #{tpu_custom_call.1} parent=59 // pred_check
          %p2730 = pneg %p174
        $region62: #{tpu_custom_call.1} parent=59 // pred_check_branch
          %2732 = sbr.rel (%p2730) target = $region64
        $region63: #{tpu_custom_call.1} parent=59 // pred_region
          %s2733 = smul.u32 80, %s30
          %s2734 = smul.u32 3, %s31
          %p2735 = scmp.lt.s32.totalorder %s29, 1
          %s2736 = scalar_select %p2735, %s29, 1
          %p2737 = scmp.lt.s32.totalorder %s2733, 79
          %s2738 = scalar_select %p2737, %s2733, 79
          %p2739 = scmp.lt.s32.totalorder %s2734, 2
          %s2740 = scalar_select %p2739, %s2734, 2
          %s2741 = smul.addr %s2738, 3
          %s2742 = sadd.s32 %s2740, %s2741
          %s2743 = smul.addr %s2736, 240
          %s2744 = sadd.s32 %s2742, %s2743
          %s2745 = smul.addr %s2744, 8
          %s2746 = scalar_lea.vmem %s4, %s2745
        $region64: #{tpu_custom_call.1} parent=59 // pred_fallthru
          _
      $region60: #{tpu_custom_call.1} parent=5 // pred_fallthru
        _
    $region6: #{tpu_custom_call.1} parent=1 // loop_footer
      %s20 = sadd.s32 1, %s16
    $region7: #{tpu_custom_call.1} parent=1 // loop_footer_branch
      %15 = sbr.rel target = $region3
    $region8: #{tpu_custom_call.1} parent=1 // loop_exit
      _
    %2747 = vsyncpa [#allocation4], 1
    %s2748 = scalar_lea.sflag [#allocation4], 1
    %2749 = vsyncpa %s2748, 1
    %2750 = vsyncpa [#allocation6], 1
    %s2751 = scalar_lea.sflag [#allocation6], 1
    %2752 = vsyncpa %s2751, 1

</llo_original>
